<compile_context>
chip_gen: v7x
topology: tpu7x:2x2x1
jax: 0.10.0
libtpu: 0.0.40
codegen_flags: <defaults>
</compile_context>

<pallas_src>
import math
import functools

import jax
import jax.numpy as jnp
from jax.experimental import pallas as pl
from jax.experimental.pallas import tpu as pltpu


def _embedding_ext_kernel(ids_ref, w_hbm, subs_ref, invf_ref, o_ref,
                          rows_buf, sem, *, dim, tok_block, distance_scale):
    """One grid step == TOK_BLOCK tokens.

    ids_ref  : SMEM scalar-prefetch ref, (N_pad,) int32 token ids
    w_hbm    : (V, D) embedding table left in HBM (manual DMA gather)
    subs_ref : (TOK_BLOCK, 1) float32 token subscripts (rotary positions)
    invf_ref : (1, D//2) float32 rotary inverse frequencies
    o_ref    : (TOK_BLOCK, D) output tile
    rows_buf : VMEM scratch (TOK_BLOCK, D) for gathered embedding rows
    sem      : DMA semaphores, one per gathered row
    """
    i = pl.program_id(0)
    base = i * tok_block
    half = dim // 2
    scale = 1.0 / math.sqrt(dim)

    # --- gather: issue all TOK_BLOCK row DMAs first so they are all in flight
    # concurrently (latency amortized across the block), then wait on all.
    copies = []
    for t in range(tok_block):
        tid = ids_ref[base + t]
        cp = pltpu.make_async_copy(
            w_hbm.at[pl.ds(tid, 1), :],
            rows_buf.at[pl.ds(t, 1), :],
            sem.at[t],
        )
        cp.start()
        copies.append(cp)
    for cp in copies:
        cp.wait()

    # --- rotary on the dense (TOK_BLOCK, D) tile, two-half formulation:
    #     out_lo = x_lo*cos - x_hi*sin ; out_hi = x_hi*cos + x_lo*sin
    # with the 1/sqrt(D) embedding scale folded into cos/sin.
    x = rows_buf[...].astype(jnp.float32)                # (TB, D) single up-cast
    x_lo = x[:, :half]
    x_hi = x[:, half:]

    pos = subs_ref[...] * jnp.float32(distance_scale)    # (TB, 1) cast-then-scale
    freqs = pos * invf_ref[...]                          # (TB, D//2) broadcast
    cos_h = jnp.cos(freqs) * scale                       # half-width transcendentals
    sin_h = jnp.sin(freqs) * scale

    o_ref[:, :half] = (x_lo * cos_h - x_hi * sin_h).astype(o_ref.dtype)
    o_ref[:, half:] = (x_hi * cos_h + x_lo * sin_h).astype(o_ref.dtype)


def embedding_ext_forward(ids, ids_sub, weight, inv_freq, distance_scale=16,
                          tok_block=8):
    """Pallas implementation of EmbeddingExt.forward.

    ids     : (B, S) int        token ids
    ids_sub : (B, S) or (B,) int token subscripts (rotary positions)
    weight  : (V, D) float      embedding table
    inv_freq: (D//2,) float     rotary inverse frequencies
    returns : (B, S, D) float   (same dtype as weight)
    """
    B, S = ids.shape
    V, D = weight.shape
    assert D % 2 == 0
    # f32 sublane packing; use a multiple of 16 for bf16/fp16 weights.
    assert tok_block % 8 == 0

    if ids_sub.ndim == 1:      # module docstring says (B,); broadcast over seq
        ids_sub = jnp.broadcast_to(ids_sub[:, None], (B, S))

    N = B * S
    n_blocks = pl.cdiv(N, tok_block)
    N_pad = n_blocks * tok_block

    ids_flat = ids.reshape(N).astype(jnp.int32)
    subs_f32 = ids_sub.reshape(N).astype(jnp.float32)    # cast BEFORE scaling
    if N_pad != N:
        ids_flat = jnp.pad(ids_flat, (0, N_pad - N))     # pad -> row 0 (in bounds)
        subs_f32 = jnp.pad(subs_f32, (0, N_pad - N))
    subs_col = subs_f32.reshape(N_pad, 1)
    invf2 = inv_freq.astype(jnp.float32).reshape(1, D // 2)

    kernel = functools.partial(
        _embedding_ext_kernel, dim=D, tok_block=tok_block,
        distance_scale=float(distance_scale))

    itemsize = jnp.dtype(weight.dtype).itemsize
    cost = pl.CostEstimate(
        flops=8 * N_pad * D,
        transcendentals=N_pad * D,
        bytes_accessed=(N_pad * D * itemsize        # gathered embedding rows
                        + N_pad * D * itemsize      # output writes
                        + N_pad * 8 + (D // 2) * 4),  # ids + subs + inv_freq
    )

    out = pl.pallas_call(
        kernel,
        out_shape=jax.ShapeDtypeStruct((N_pad, D), weight.dtype),
        grid_spec=pltpu.PrefetchScalarGridSpec(
            num_scalar_prefetch=1,                                   # ids -> SMEM
            grid=(n_blocks,),
            in_specs=[
                pl.BlockSpec(memory_space=pl.ANY),                   # weight in HBM
                pl.BlockSpec((tok_block, 1), lambda i, ids_sm: (i, 0)),   # subs
                pl.BlockSpec((1, D // 2), lambda i, ids_sm: (0, 0)),      # inv_freq
            ],
            out_specs=pl.BlockSpec((tok_block, D), lambda i, ids_sm: (i, 0)),
            scratch_shapes=[
                pltpu.VMEM((tok_block, D), weight.dtype),            # gathered rows
                pltpu.SemaphoreType.DMA((tok_block,)),
            ],
        ),
        compiler_params=pltpu.CompilerParams(
            dimension_semantics=("parallel",),   # blocks independent -> v7x megacore
        ),
        cost_estimate=cost,
    )(ids_flat, weight, subs_col, invf2)

    return out[:N].reshape(B, S, D)


def embedding_ext_ref(ids, ids_sub, weight, inv_freq, distance_scale=16):
    """Pure-JAX reference mirroring the PyTorch forward."""
    D = weight.shape[1]
    embeds = weight[ids] / math.sqrt(D)                           # (B,S,D)
    pos = (ids_sub * distance_scale).astype(jnp.float32)          # (B,S)
    freqs = pos[..., None] * inv_freq[None, None, :]              # (B,S,D/2)
    emb = jnp.concatenate([freqs, freqs], axis=-1)                # (B,S,D)
    rot = jnp.concatenate([-embeds[..., D // 2:], embeds[..., :D // 2]], axis=-1)
    return embeds * jnp.cos(emb) + rot * jnp.sin(emb)


if __name__ == "__main__":
    # Small, deterministic config consistent with the module.
    vocab_size = 64
    embedding_size = 32         # dim_model
    distance_scale = 16
    B, S = 2, 8

    key = jax.random.PRNGKey(0)
    k_w, k_ids, k_sub = jax.random.split(key, 3)

    # Parameter init: normal(init_mean=0, init_std=1), kept in float32 here
    # (module default is fp16; dtype choice only).
    weight = jax.random.normal(k_w, (vocab_size, embedding_size), dtype=jnp.float32)
    # RotaryEmbedding inv_freq (base=10000).
    inv_freq = 1.0 / (10000.0 ** (jnp.arange(0, embedding_size, 2,
                                             dtype=jnp.float32) / embedding_size))

    ids = jax.random.randint(k_ids, (B, S), 0, vocab_size, dtype=jnp.int32)
    ids_sub = jax.random.randint(k_sub, (B, S), 0, 128, dtype=jnp.int32)

    out = embedding_ext_forward(ids, ids_sub, weight, inv_freq, distance_scale,
                                tok_block=8)
    out = jax.block_until_ready(out)

    ref = embedding_ext_ref(ids, ids_sub, weight, inv_freq, distance_scale)
    assert out.shape == (B, S, embedding_size)
    assert jnp.allclose(out, ref, atol=1e-5, rtol=1e-5), "mismatch vs reference"

    # TODO(synk): EmbeddingExt.projection (tied-weight linear to vocab logits) is a
    # separate method, not part of forward(); not implemented here.
    print("KERNEL_OK")
</pallas_src>

<mosaic_0001>
module attributes {stable_mosaic.version = 11 : i64} {
  func.func @_embedding_ext_kernel(%arg0: i32, %arg1: memref<16xi32, #tpu.memory_space<smem>>, %arg2: memref<64x32xf32, #tpu.memory_space<any>>, %arg3: memref<8x1xf32, #tpu.memory_space<vmem>>, %arg4: memref<1x16xf32, #tpu.memory_space<vmem>>, %arg5: memref<8x32xf32, #tpu.memory_space<vmem>>, %arg6: memref<8x32xf32, #tpu.memory_space<vmem>>, %arg7: memref<8x!tpu.dma_semaphore, #tpu.memory_space<semaphore_mem>>) attributes {dimension_semantics = [#tpu.dimension_semantics<parallel>], iteration_bounds = array<i64: 2>, scalar_prefetch = 1 : i64, scratch_operands = 2 : i64, tpu.core_type = #tpu.core_type<tc>, window_params = [{}, {transform_indices = @transform_1, window_bounds = array<i64: 8, 1>}, {pipeline_mode = #tpu.pipeline_mode<synchronous>, transform_indices = @transform_2, window_bounds = array<i64: 1, 16>}, {transform_indices = @transform_3, window_bounds = array<i64: 8, 32>}]} {
    %c8_i32 = arith.constant 8 : i32
    %0 = arith.muli %arg0, %c8_i32 : i32
    %c0_i32 = arith.constant 0 : i32
    %1 = arith.addi %0, %c0_i32 : i32
    %2 = arith.index_cast %1 : i32 to index
    %3 = memref.load %arg1[%2] : memref<16xi32, #tpu.memory_space<smem>>
    %c0_i32_0 = arith.constant 0 : i32
    %c0_i32_1 = arith.constant 0 : i32
    %4 = tpu.memref_slice %arg2[%3, %c0_i32_1] : memref<64x32xf32, #tpu.memory_space<any>> -> memref<1x32xf32, #tpu.memory_space<any>>
    %c0_i32_2 = arith.constant 0 : i32
    %c0_i32_3 = arith.constant 0 : i32
    %5 = tpu.memref_slice %arg6[%c0_i32_2, %c0_i32_3] : memref<8x32xf32, #tpu.memory_space<vmem>> -> memref<1x32xf32, #tpu.memory_space<vmem>>
    %6 = tpu.memref_slice %arg7[%c0_i32_0] : memref<8x!tpu.dma_semaphore, #tpu.memory_space<semaphore_mem>> -> memref<1x!tpu.dma_semaphore, #tpu.memory_space<semaphore_mem>>
    %7 = tpu.memref_squeeze %6 : memref<1x!tpu.dma_semaphore, #tpu.memory_space<semaphore_mem>> -> memref<!tpu.dma_semaphore, #tpu.memory_space<semaphore_mem>>
    tpu.enqueue_dma source(%4 : memref<1x32xf32, #tpu.memory_space<any>>) target(%5 : memref<1x32xf32, #tpu.memory_space<vmem>>) target_semaphore(%7 : memref<!tpu.dma_semaphore, #tpu.memory_space<semaphore_mem>>)
    %c1_i32 = arith.constant 1 : i32
    %8 = arith.addi %0, %c1_i32 : i32
    %9 = arith.index_cast %8 : i32 to index
    %10 = memref.load %arg1[%9] : memref<16xi32, #tpu.memory_space<smem>>
    %c1_i32_4 = arith.constant 1 : i32
    %c0_i32_5 = arith.constant 0 : i32
    %11 = tpu.memref_slice %arg2[%10, %c0_i32_5] : memref<64x32xf32, #tpu.memory_space<any>> -> memref<1x32xf32, #tpu.memory_space<any>>
    %c1_i32_6 = arith.constant 1 : i32
    %c0_i32_7 = arith.constant 0 : i32
    %12 = tpu.memref_slice %arg6[%c1_i32_6, %c0_i32_7] : memref<8x32xf32, #tpu.memory_space<vmem>> -> memref<1x32xf32, #tpu.memory_space<vmem>>
    %13 = tpu.memref_slice %arg7[%c1_i32_4] : memref<8x!tpu.dma_semaphore, #tpu.memory_space<semaphore_mem>> -> memref<1x!tpu.dma_semaphore, #tpu.memory_space<semaphore_mem>>
    %14 = tpu.memref_squeeze %13 : memref<1x!tpu.dma_semaphore, #tpu.memory_space<semaphore_mem>> -> memref<!tpu.dma_semaphore, #tpu.memory_space<semaphore_mem>>
    tpu.enqueue_dma source(%11 : memref<1x32xf32, #tpu.memory_space<any>>) target(%12 : memref<1x32xf32, #tpu.memory_space<vmem>>) target_semaphore(%14 : memref<!tpu.dma_semaphore, #tpu.memory_space<semaphore_mem>>)
    %c2_i32 = arith.constant 2 : i32
    %15 = arith.addi %0, %c2_i32 : i32
    %16 = arith.index_cast %15 : i32 to index
    %17 = memref.load %arg1[%16] : memref<16xi32, #tpu.memory_space<smem>>
    %c2_i32_8 = arith.constant 2 : i32
    %c0_i32_9 = arith.constant 0 : i32
    %18 = tpu.memref_slice %arg2[%17, %c0_i32_9] : memref<64x32xf32, #tpu.memory_space<any>> -> memref<1x32xf32, #tpu.memory_space<any>>
    %c2_i32_10 = arith.constant 2 : i32
    %c0_i32_11 = arith.constant 0 : i32
    %19 = tpu.memref_slice %arg6[%c2_i32_10, %c0_i32_11] : memref<8x32xf32, #tpu.memory_space<vmem>> -> memref<1x32xf32, #tpu.memory_space<vmem>>
    %20 = tpu.memref_slice %arg7[%c2_i32_8] : memref<8x!tpu.dma_semaphore, #tpu.memory_space<semaphore_mem>> -> memref<1x!tpu.dma_semaphore, #tpu.memory_space<semaphore_mem>>
    %21 = tpu.memref_squeeze %20 : memref<1x!tpu.dma_semaphore, #tpu.memory_space<semaphore_mem>> -> memref<!tpu.dma_semaphore, #tpu.memory_space<semaphore_mem>>
    tpu.enqueue_dma source(%18 : memref<1x32xf32, #tpu.memory_space<any>>) target(%19 : memref<1x32xf32, #tpu.memory_space<vmem>>) target_semaphore(%21 : memref<!tpu.dma_semaphore, #tpu.memory_space<semaphore_mem>>)
    %c3_i32 = arith.constant 3 : i32
    %22 = arith.addi %0, %c3_i32 : i32
    %23 = arith.index_cast %22 : i32 to index
    %24 = memref.load %arg1[%23] : memref<16xi32, #tpu.memory_space<smem>>
    %c3_i32_12 = arith.constant 3 : i32
    %c0_i32_13 = arith.constant 0 : i32
    %25 = tpu.memref_slice %arg2[%24, %c0_i32_13] : memref<64x32xf32, #tpu.memory_space<any>> -> memref<1x32xf32, #tpu.memory_space<any>>
    %c3_i32_14 = arith.constant 3 : i32
    %c0_i32_15 = arith.constant 0 : i32
    %26 = tpu.memref_slice %arg6[%c3_i32_14, %c0_i32_15] : memref<8x32xf32, #tpu.memory_space<vmem>> -> memref<1x32xf32, #tpu.memory_space<vmem>>
    %27 = tpu.memref_slice %arg7[%c3_i32_12] : memref<8x!tpu.dma_semaphore, #tpu.memory_space<semaphore_mem>> -> memref<1x!tpu.dma_semaphore, #tpu.memory_space<semaphore_mem>>
    %28 = tpu.memref_squeeze %27 : memref<1x!tpu.dma_semaphore, #tpu.memory_space<semaphore_mem>> -> memref<!tpu.dma_semaphore, #tpu.memory_space<semaphore_mem>>
    tpu.enqueue_dma source(%25 : memref<1x32xf32, #tpu.memory_space<any>>) target(%26 : memref<1x32xf32, #tpu.memory_space<vmem>>) target_semaphore(%28 : memref<!tpu.dma_semaphore, #tpu.memory_space<semaphore_mem>>)
    %c4_i32 = arith.constant 4 : i32
    %29 = arith.addi %0, %c4_i32 : i32
    %30 = arith.index_cast %29 : i32 to index
    %31 = memref.load %arg1[%30] : memref<16xi32, #tpu.memory_space<smem>>
    %c4_i32_16 = arith.constant 4 : i32
    %c0_i32_17 = arith.constant 0 : i32
    %32 = tpu.memref_slice %arg2[%31, %c0_i32_17] : memref<64x32xf32, #tpu.memory_space<any>> -> memref<1x32xf32, #tpu.memory_space<any>>
    %c4_i32_18 = arith.constant 4 : i32
    %c0_i32_19 = arith.constant 0 : i32
    %33 = tpu.memref_slice %arg6[%c4_i32_18, %c0_i32_19] : memref<8x32xf32, #tpu.memory_space<vmem>> -> memref<1x32xf32, #tpu.memory_space<vmem>>
    %34 = tpu.memref_slice %arg7[%c4_i32_16] : memref<8x!tpu.dma_semaphore, #tpu.memory_space<semaphore_mem>> -> memref<1x!tpu.dma_semaphore, #tpu.memory_space<semaphore_mem>>
    %35 = tpu.memref_squeeze %34 : memref<1x!tpu.dma_semaphore, #tpu.memory_space<semaphore_mem>> -> memref<!tpu.dma_semaphore, #tpu.memory_space<semaphore_mem>>
    tpu.enqueue_dma source(%32 : memref<1x32xf32, #tpu.memory_space<any>>) target(%33 : memref<1x32xf32, #tpu.memory_space<vmem>>) target_semaphore(%35 : memref<!tpu.dma_semaphore, #tpu.memory_space<semaphore_mem>>)
    %c5_i32 = arith.constant 5 : i32
    %36 = arith.addi %0, %c5_i32 : i32
    %37 = arith.index_cast %36 : i32 to index
    %38 = memref.load %arg1[%37] : memref<16xi32, #tpu.memory_space<smem>>
    %c5_i32_20 = arith.constant 5 : i32
    %c0_i32_21 = arith.constant 0 : i32
    %39 = tpu.memref_slice %arg2[%38, %c0_i32_21] : memref<64x32xf32, #tpu.memory_space<any>> -> memref<1x32xf32, #tpu.memory_space<any>>
    %c5_i32_22 = arith.constant 5 : i32
    %c0_i32_23 = arith.constant 0 : i32
    %40 = tpu.memref_slice %arg6[%c5_i32_22, %c0_i32_23] : memref<8x32xf32, #tpu.memory_space<vmem>> -> memref<1x32xf32, #tpu.memory_space<vmem>>
    %41 = tpu.memref_slice %arg7[%c5_i32_20] : memref<8x!tpu.dma_semaphore, #tpu.memory_space<semaphore_mem>> -> memref<1x!tpu.dma_semaphore, #tpu.memory_space<semaphore_mem>>
    %42 = tpu.memref_squeeze %41 : memref<1x!tpu.dma_semaphore, #tpu.memory_space<semaphore_mem>> -> memref<!tpu.dma_semaphore, #tpu.memory_space<semaphore_mem>>
    tpu.enqueue_dma source(%39 : memref<1x32xf32, #tpu.memory_space<any>>) target(%40 : memref<1x32xf32, #tpu.memory_space<vmem>>) target_semaphore(%42 : memref<!tpu.dma_semaphore, #tpu.memory_space<semaphore_mem>>)
    %c6_i32 = arith.constant 6 : i32
    %43 = arith.addi %0, %c6_i32 : i32
    %44 = arith.index_cast %43 : i32 to index
    %45 = memref.load %arg1[%44] : memref<16xi32, #tpu.memory_space<smem>>
    %c6_i32_24 = arith.constant 6 : i32
    %c0_i32_25 = arith.constant 0 : i32
    %46 = tpu.memref_slice %arg2[%45, %c0_i32_25] : memref<64x32xf32, #tpu.memory_space<any>> -> memref<1x32xf32, #tpu.memory_space<any>>
    %c6_i32_26 = arith.constant 6 : i32
    %c0_i32_27 = arith.constant 0 : i32
    %47 = tpu.memref_slice %arg6[%c6_i32_26, %c0_i32_27] : memref<8x32xf32, #tpu.memory_space<vmem>> -> memref<1x32xf32, #tpu.memory_space<vmem>>
    %48 = tpu.memref_slice %arg7[%c6_i32_24] : memref<8x!tpu.dma_semaphore, #tpu.memory_space<semaphore_mem>> -> memref<1x!tpu.dma_semaphore, #tpu.memory_space<semaphore_mem>>
    %49 = tpu.memref_squeeze %48 : memref<1x!tpu.dma_semaphore, #tpu.memory_space<semaphore_mem>> -> memref<!tpu.dma_semaphore, #tpu.memory_space<semaphore_mem>>
    tpu.enqueue_dma source(%46 : memref<1x32xf32, #tpu.memory_space<any>>) target(%47 : memref<1x32xf32, #tpu.memory_space<vmem>>) target_semaphore(%49 : memref<!tpu.dma_semaphore, #tpu.memory_space<semaphore_mem>>)
    %c7_i32 = arith.constant 7 : i32
    %50 = arith.addi %0, %c7_i32 : i32
    %51 = arith.index_cast %50 : i32 to index
    %52 = memref.load %arg1[%51] : memref<16xi32, #tpu.memory_space<smem>>
    %c7_i32_28 = arith.constant 7 : i32
    %c0_i32_29 = arith.constant 0 : i32
    %53 = tpu.memref_slice %arg2[%52, %c0_i32_29] : memref<64x32xf32, #tpu.memory_space<any>> -> memref<1x32xf32, #tpu.memory_space<any>>
    %c7_i32_30 = arith.constant 7 : i32
    %c0_i32_31 = arith.constant 0 : i32
    %54 = tpu.memref_slice %arg6[%c7_i32_30, %c0_i32_31] : memref<8x32xf32, #tpu.memory_space<vmem>> -> memref<1x32xf32, #tpu.memory_space<vmem>>
    %55 = tpu.memref_slice %arg7[%c7_i32_28] : memref<8x!tpu.dma_semaphore, #tpu.memory_space<semaphore_mem>> -> memref<1x!tpu.dma_semaphore, #tpu.memory_space<semaphore_mem>>
    %56 = tpu.memref_squeeze %55 : memref<1x!tpu.dma_semaphore, #tpu.memory_space<semaphore_mem>> -> memref<!tpu.dma_semaphore, #tpu.memory_space<semaphore_mem>>
    tpu.enqueue_dma source(%53 : memref<1x32xf32, #tpu.memory_space<any>>) target(%54 : memref<1x32xf32, #tpu.memory_space<vmem>>) target_semaphore(%56 : memref<!tpu.dma_semaphore, #tpu.memory_space<semaphore_mem>>)
    %c0_i32_32 = arith.constant 0 : i32
    %c0_i32_33 = arith.constant 0 : i32
    %57 = tpu.memref_slice %arg2[%3, %c0_i32_33] : memref<64x32xf32, #tpu.memory_space<any>> -> memref<1x32xf32, #tpu.memory_space<any>>
    %c0_i32_34 = arith.constant 0 : i32
    %c0_i32_35 = arith.constant 0 : i32
    %58 = tpu.memref_slice %arg6[%c0_i32_34, %c0_i32_35] : memref<8x32xf32, #tpu.memory_space<vmem>> -> memref<1x32xf32, #tpu.memory_space<vmem>>
    %59 = tpu.memref_slice %arg7[%c0_i32_32] : memref<8x!tpu.dma_semaphore, #tpu.memory_space<semaphore_mem>> -> memref<1x!tpu.dma_semaphore, #tpu.memory_space<semaphore_mem>>
    %60 = tpu.memref_squeeze %59 : memref<1x!tpu.dma_semaphore, #tpu.memory_space<semaphore_mem>> -> memref<!tpu.dma_semaphore, #tpu.memory_space<semaphore_mem>>
    tpu.wait_dma2 semaphore(%60 : memref<!tpu.dma_semaphore, #tpu.memory_space<semaphore_mem>>) src(%57 : memref<1x32xf32, #tpu.memory_space<any>>) dst(%58 : memref<1x32xf32, #tpu.memory_space<vmem>>)
    %c1_i32_36 = arith.constant 1 : i32
    %c0_i32_37 = arith.constant 0 : i32
    %61 = tpu.memref_slice %arg2[%10, %c0_i32_37] : memref<64x32xf32, #tpu.memory_space<any>> -> memref<1x32xf32, #tpu.memory_space<any>>
    %c1_i32_38 = arith.constant 1 : i32
    %c0_i32_39 = arith.constant 0 : i32
    %62 = tpu.memref_slice %arg6[%c1_i32_38, %c0_i32_39] : memref<8x32xf32, #tpu.memory_space<vmem>> -> memref<1x32xf32, #tpu.memory_space<vmem>>
    %63 = tpu.memref_slice %arg7[%c1_i32_36] : memref<8x!tpu.dma_semaphore, #tpu.memory_space<semaphore_mem>> -> memref<1x!tpu.dma_semaphore, #tpu.memory_space<semaphore_mem>>
    %64 = tpu.memref_squeeze %63 : memref<1x!tpu.dma_semaphore, #tpu.memory_space<semaphore_mem>> -> memref<!tpu.dma_semaphore, #tpu.memory_space<semaphore_mem>>
    tpu.wait_dma2 semaphore(%64 : memref<!tpu.dma_semaphore, #tpu.memory_space<semaphore_mem>>) src(%61 : memref<1x32xf32, #tpu.memory_space<any>>) dst(%62 : memref<1x32xf32, #tpu.memory_space<vmem>>)
    %c2_i32_40 = arith.constant 2 : i32
    %c0_i32_41 = arith.constant 0 : i32
    %65 = tpu.memref_slice %arg2[%17, %c0_i32_41] : memref<64x32xf32, #tpu.memory_space<any>> -> memref<1x32xf32, #tpu.memory_space<any>>
    %c2_i32_42 = arith.constant 2 : i32
    %c0_i32_43 = arith.constant 0 : i32
    %66 = tpu.memref_slice %arg6[%c2_i32_42, %c0_i32_43] : memref<8x32xf32, #tpu.memory_space<vmem>> -> memref<1x32xf32, #tpu.memory_space<vmem>>
    %67 = tpu.memref_slice %arg7[%c2_i32_40] : memref<8x!tpu.dma_semaphore, #tpu.memory_space<semaphore_mem>> -> memref<1x!tpu.dma_semaphore, #tpu.memory_space<semaphore_mem>>
    %68 = tpu.memref_squeeze %67 : memref<1x!tpu.dma_semaphore, #tpu.memory_space<semaphore_mem>> -> memref<!tpu.dma_semaphore, #tpu.memory_space<semaphore_mem>>
    tpu.wait_dma2 semaphore(%68 : memref<!tpu.dma_semaphore, #tpu.memory_space<semaphore_mem>>) src(%65 : memref<1x32xf32, #tpu.memory_space<any>>) dst(%66 : memref<1x32xf32, #tpu.memory_space<vmem>>)
    %c3_i32_44 = arith.constant 3 : i32
    %c0_i32_45 = arith.constant 0 : i32
    %69 = tpu.memref_slice %arg2[%24, %c0_i32_45] : memref<64x32xf32, #tpu.memory_space<any>> -> memref<1x32xf32, #tpu.memory_space<any>>
    %c3_i32_46 = arith.constant 3 : i32
    %c0_i32_47 = arith.constant 0 : i32
    %70 = tpu.memref_slice %arg6[%c3_i32_46, %c0_i32_47] : memref<8x32xf32, #tpu.memory_space<vmem>> -> memref<1x32xf32, #tpu.memory_space<vmem>>
    %71 = tpu.memref_slice %arg7[%c3_i32_44] : memref<8x!tpu.dma_semaphore, #tpu.memory_space<semaphore_mem>> -> memref<1x!tpu.dma_semaphore, #tpu.memory_space<semaphore_mem>>
    %72 = tpu.memref_squeeze %71 : memref<1x!tpu.dma_semaphore, #tpu.memory_space<semaphore_mem>> -> memref<!tpu.dma_semaphore, #tpu.memory_space<semaphore_mem>>
    tpu.wait_dma2 semaphore(%72 : memref<!tpu.dma_semaphore, #tpu.memory_space<semaphore_mem>>) src(%69 : memref<1x32xf32, #tpu.memory_space<any>>) dst(%70 : memref<1x32xf32, #tpu.memory_space<vmem>>)
    %c4_i32_48 = arith.constant 4 : i32
    %c0_i32_49 = arith.constant 0 : i32
    %73 = tpu.memref_slice %arg2[%31, %c0_i32_49] : memref<64x32xf32, #tpu.memory_space<any>> -> memref<1x32xf32, #tpu.memory_space<any>>
    %c4_i32_50 = arith.constant 4 : i32
    %c0_i32_51 = arith.constant 0 : i32
    %74 = tpu.memref_slice %arg6[%c4_i32_50, %c0_i32_51] : memref<8x32xf32, #tpu.memory_space<vmem>> -> memref<1x32xf32, #tpu.memory_space<vmem>>
    %75 = tpu.memref_slice %arg7[%c4_i32_48] : memref<8x!tpu.dma_semaphore, #tpu.memory_space<semaphore_mem>> -> memref<1x!tpu.dma_semaphore, #tpu.memory_space<semaphore_mem>>
    %76 = tpu.memref_squeeze %75 : memref<1x!tpu.dma_semaphore, #tpu.memory_space<semaphore_mem>> -> memref<!tpu.dma_semaphore, #tpu.memory_space<semaphore_mem>>
    tpu.wait_dma2 semaphore(%76 : memref<!tpu.dma_semaphore, #tpu.memory_space<semaphore_mem>>) src(%73 : memref<1x32xf32, #tpu.memory_space<any>>) dst(%74 : memref<1x32xf32, #tpu.memory_space<vmem>>)
    %c5_i32_52 = arith.constant 5 : i32
    %c0_i32_53 = arith.constant 0 : i32
    %77 = tpu.memref_slice %arg2[%38, %c0_i32_53] : memref<64x32xf32, #tpu.memory_space<any>> -> memref<1x32xf32, #tpu.memory_space<any>>
    %c5_i32_54 = arith.constant 5 : i32
    %c0_i32_55 = arith.constant 0 : i32
    %78 = tpu.memref_slice %arg6[%c5_i32_54, %c0_i32_55] : memref<8x32xf32, #tpu.memory_space<vmem>> -> memref<1x32xf32, #tpu.memory_space<vmem>>
    %79 = tpu.memref_slice %arg7[%c5_i32_52] : memref<8x!tpu.dma_semaphore, #tpu.memory_space<semaphore_mem>> -> memref<1x!tpu.dma_semaphore, #tpu.memory_space<semaphore_mem>>
    %80 = tpu.memref_squeeze %79 : memref<1x!tpu.dma_semaphore, #tpu.memory_space<semaphore_mem>> -> memref<!tpu.dma_semaphore, #tpu.memory_space<semaphore_mem>>
    tpu.wait_dma2 semaphore(%80 : memref<!tpu.dma_semaphore, #tpu.memory_space<semaphore_mem>>) src(%77 : memref<1x32xf32, #tpu.memory_space<any>>) dst(%78 : memref<1x32xf32, #tpu.memory_space<vmem>>)
    %c6_i32_56 = arith.constant 6 : i32
    %c0_i32_57 = arith.constant 0 : i32
    %81 = tpu.memref_slice %arg2[%45, %c0_i32_57] : memref<64x32xf32, #tpu.memory_space<any>> -> memref<1x32xf32, #tpu.memory_space<any>>
    %c6_i32_58 = arith.constant 6 : i32
    %c0_i32_59 = arith.constant 0 : i32
    %82 = tpu.memref_slice %arg6[%c6_i32_58, %c0_i32_59] : memref<8x32xf32, #tpu.memory_space<vmem>> -> memref<1x32xf32, #tpu.memory_space<vmem>>
    %83 = tpu.memref_slice %arg7[%c6_i32_56] : memref<8x!tpu.dma_semaphore, #tpu.memory_space<semaphore_mem>> -> memref<1x!tpu.dma_semaphore, #tpu.memory_space<semaphore_mem>>
    %84 = tpu.memref_squeeze %83 : memref<1x!tpu.dma_semaphore, #tpu.memory_space<semaphore_mem>> -> memref<!tpu.dma_semaphore, #tpu.memory_space<semaphore_mem>>
    tpu.wait_dma2 semaphore(%84 : memref<!tpu.dma_semaphore, #tpu.memory_space<semaphore_mem>>) src(%81 : memref<1x32xf32, #tpu.memory_space<any>>) dst(%82 : memref<1x32xf32, #tpu.memory_space<vmem>>)
    %c7_i32_60 = arith.constant 7 : i32
    %c0_i32_61 = arith.constant 0 : i32
    %85 = tpu.memref_slice %arg2[%52, %c0_i32_61] : memref<64x32xf32, #tpu.memory_space<any>> -> memref<1x32xf32, #tpu.memory_space<any>>
    %c7_i32_62 = arith.constant 7 : i32
    %c0_i32_63 = arith.constant 0 : i32
    %86 = tpu.memref_slice %arg6[%c7_i32_62, %c0_i32_63] : memref<8x32xf32, #tpu.memory_space<vmem>> -> memref<1x32xf32, #tpu.memory_space<vmem>>
    %87 = tpu.memref_slice %arg7[%c7_i32_60] : memref<8x!tpu.dma_semaphore, #tpu.memory_space<semaphore_mem>> -> memref<1x!tpu.dma_semaphore, #tpu.memory_space<semaphore_mem>>
    %88 = tpu.memref_squeeze %87 : memref<1x!tpu.dma_semaphore, #tpu.memory_space<semaphore_mem>> -> memref<!tpu.dma_semaphore, #tpu.memory_space<semaphore_mem>>
    tpu.wait_dma2 semaphore(%88 : memref<!tpu.dma_semaphore, #tpu.memory_space<semaphore_mem>>) src(%85 : memref<1x32xf32, #tpu.memory_space<any>>) dst(%86 : memref<1x32xf32, #tpu.memory_space<vmem>>)
    %c0 = arith.constant 0 : index
    %c0_64 = arith.constant 0 : index
    %89 = vector.load %arg6[%c0, %c0_64] : memref<8x32xf32, #tpu.memory_space<vmem>>, vector<8x32xf32>
    %90 = vector.extract_strided_slice %89 {offsets = [0, 0], sizes = [8, 16], strides = [1, 1]} : vector<8x32xf32> to vector<8x16xf32>
    %91 = vector.extract_strided_slice %89 {offsets = [0, 16], sizes = [8, 16], strides = [1, 1]} : vector<8x32xf32> to vector<8x16xf32>
    %c0_65 = arith.constant 0 : index
    %c0_66 = arith.constant 0 : index
    %92 = vector.load %arg3[%c0_65, %c0_66] : memref<8x1xf32, #tpu.memory_space<vmem>>, vector<8x1xf32>
    %cst = arith.constant 1.600000e+01 : f32
    %93 = vector.broadcast %cst : f32 to vector<8x1xf32>
    %94 = arith.mulf %92, %93 : vector<8x1xf32>
    %c0_67 = arith.constant 0 : index
    %c0_68 = arith.constant 0 : index
    %95 = vector.load %arg4[%c0_67, %c0_68] : memref<1x16xf32, #tpu.memory_space<vmem>>, vector<1x16xf32>
    %96 = vector.broadcast %94 : vector<8x1xf32> to vector<8x16xf32>
    %97 = vector.broadcast %95 : vector<1x16xf32> to vector<8x16xf32>
    %98 = arith.mulf %96, %97 : vector<8x16xf32>
    %99 = math.cos %98 : vector<8x16xf32>
    %cst_69 = arith.constant 0.176776692 : f32
    %100 = vector.broadcast %cst_69 : f32 to vector<8x16xf32>
    %101 = arith.mulf %99, %100 : vector<8x16xf32>
    %102 = math.sin %98 : vector<8x16xf32>
    %cst_70 = arith.constant 0.176776692 : f32
    %103 = vector.broadcast %cst_70 : f32 to vector<8x16xf32>
    %104 = arith.mulf %102, %103 : vector<8x16xf32>
    %105 = arith.mulf %90, %101 : vector<8x16xf32>
    %106 = arith.mulf %91, %104 : vector<8x16xf32>
    %107 = arith.subf %105, %106 : vector<8x16xf32>
    %c0_71 = arith.constant 0 : index
    %c0_72 = arith.constant 0 : index
    %108 = vector.load %arg5[%c0_71, %c0_72] : memref<8x32xf32, #tpu.memory_space<vmem>>, vector<8x16xf32>
    tpu.vector_store %arg5[%c0_71, %c0_72], %107 {strides = array<i32>} : memref<8x32xf32, #tpu.memory_space<vmem>>, vector<8x16xf32>,
    %109 = arith.mulf %91, %101 : vector<8x16xf32>
    %110 = arith.mulf %90, %104 : vector<8x16xf32>
    %111 = arith.addf %109, %110 : vector<8x16xf32>
    %c0_73 = arith.constant 0 : index
    %c16 = arith.constant 16 : index
    %112 = vector.load %arg5[%c0_73, %c16] : memref<8x32xf32, #tpu.memory_space<vmem>>, vector<8x16xf32>
    tpu.vector_store %arg5[%c0_73, %c16], %111 {strides = array<i32>} : memref<8x32xf32, #tpu.memory_space<vmem>>, vector<8x16xf32>,
    return
  }
  func.func @transform_1(%arg0: i32, %arg1: memref<16xi32, #tpu.memory_space<smem>>) -> (i32, i32) {
    %c0_i32 = arith.constant 0 : i32
    %c0_i32_0 = arith.constant 0 : i32
    return %arg0, %c0_i32 : i32, i32
  }
  func.func @transform_2(%arg0: i32, %arg1: memref<16xi32, #tpu.memory_space<smem>>) -> (i32, i32) {
    %c0_i32 = arith.constant 0 : i32
    %c0_i32_0 = arith.constant 0 : i32
    %c0_i32_1 = arith.constant 0 : i32
    return %c0_i32, %c0_i32_0 : i32, i32
  }
  func.func @transform_3(%arg0: i32, %arg1: memref<16xi32, #tpu.memory_space<smem>>) -> (i32, i32) {
    %c0_i32 = arith.constant 0 : i32
    %c0_i32_0 = arith.constant 0 : i32
    return %arg0, %c0_i32 : i32, i32
  }
}

</mosaic_0001>

<llo_original>
// kernel: tpu_custom_call.1
$region0: #{tpu_custom_call.1}
  #allocation0 [shape = 'u32[]', space=smem, size = 0x4, offset = 0x4, fixed_abs, tag = 'smem constant byte address 0x4 - core index']
  #allocation1 [shape = 'u32[144,128]{1,0:T(1,128)}', space=vmem, size = 0x12000, scoped, tag = 'internal scratch']
  #allocation2 [shape = 'f32[8,32]{1,0:T(8,128)}', space=vmem, size = 0x1000, scoped, tag = 'scratch operand']
  #allocation3 [shape = 's32[8]{0}', space=sflag, size = 0x20, scoped, tag = 'scratch operand']
  #allocation4 [shape = 's32[1]{0}', space=sflag, size = 0x4, scoped, tag = 'scoped memory for tpu_custom_call.1']
  #allocation5 [shape = 'u8[512]{0}', space=smem, size = 0x200, scoped, tag = 'prefetched SMEM operand 0']
  #allocation8 [shape = 's32[]', space=sflag, size = 0x4, offset = 0, fixed_abs, tag = 'sflag constant byte address 0x0 - dummy sync flag']
  #allocation9 [shape = 's32[]', space=sflag, size = 0x4, offset = 0, fixed_abs, tag = 'sflag constant byte address 0x0 - dummy sync flag']
  #allocation10 [shape = 's32[]', space=sflag, size = 0x4, offset = 0, fixed_abs, tag = 'sflag constant byte address 0x0 - dummy sync flag']
  #allocation11 [shape = 's32[]', space=sflag, size = 0x4, offset = 0, fixed_abs, tag = 'sflag constant byte address 0x0 - dummy sync flag']
  #allocation12 [shape = 's32[]', space=sflag, size = 0x4, offset = 0, fixed_abs, tag = 'sflag constant byte address 0x0 - dummy sync flag']
  #allocation13 [shape = 's32[]', space=sflag, size = 0x4, offset = 0, fixed_abs, tag = 'sflag constant byte address 0x0 - dummy sync flag']
  #allocation14 [shape = 's32[]', space=sflag, size = 0x4, offset = 0, fixed_abs, tag = 'sflag constant byte address 0x0 - dummy sync flag']
  #allocation15 [shape = 's32[]', space=sflag, size = 0x4, offset = 0, fixed_abs, tag = 'sflag constant byte address 0x0 - dummy sync flag']
  %s0 = inlined_call_operand.vmem [shape: s32[16], index: 0, kind: input, shape index: {}]
  %s1 = inlined_call_operand.vmem [shape: f32[64,32], index: 1, kind: input, shape index: {}]
  %s2 = inlined_call_operand.vmem [shape: f32[16,1], index: 2, kind: input, shape index: {}]
  %s3 = inlined_call_operand.vmem [shape: f32[1,16], index: 3, kind: input, shape index: {}]
  %s4 = inlined_call_operand.hbm [shape: f32[16,32], index: 4, kind: output, shape index: {}]
  %s5 = sld [smem:[#allocation0]]
  $region281: #{tpu_custom_call.1} parent=0
    _
  %s7 = ssub.s32 1, %s5
  %s8 = scalar_select 0, %s7, %s5
  %s9 = sshll.u32 %s0, 4
  %s10 = int_to_ptr.vmem [resolvable:$true] %s9
  %12 = dma.vmem_to_smem %s10, 16, [#allocation5], [#allocation4]
  %13 = dma.done [#allocation4], 16
  %14 = sfence
  $region1: #{tpu_custom_call.1} parent=0
    #allocation6 [shape = 'u8[8192]{0}', space=vmem, size = 0x2000, scoped, tag = 'output window, operand 0']
    #allocation7 [shape = 's32[2]{0}', space=sflag, size = 0x8, scoped, tag = 'scoped memory for tpu_custom_call.1']
    %15 = vsyncpa [#allocation7], 0
    %s16 = scalar_lea.sflag [#allocation7], 1
    %17 = vsyncpa %s16, 0
    loop: start=0, step=1, limit=4
    $region2: #{tpu_custom_call.1} parent=1 // loop_pre_header
      _
    $region3: #{tpu_custom_call.1} parent=1 // loop_header
      %s19 = sphi 0, %s23
      %p20 = scmp.ge.s32.totalorder %s19, 4
      %s29 = sphi 0, %s31
      %s32 = sphi 0, %s29
      %s33 = sphi 0, %s32
      %s49 = sphi 0, %s33
      %s53 = sphi 0, %s53
      %s55 = sphi 0, %s53
      %s56 = sphi 0, %s55
      %s70 = sphi 0, %s56
      %s76 = sphi 0, %s78
      %s79 = sphi 0, %s76
      %s80 = sphi 0, %s79
      %s96 = sphi 0, %s80
    $region4: #{tpu_custom_call.1} parent=1 // loop_header_branch
      %22 = sbr.rel (%p20) target = $region8
    $region5: #{tpu_custom_call.1} parent=1 // loop_body
      %s24 = ssub.s32 %s19, 1
      %s25 = ssub.s32 %s19, 2
      %s26 = sadd.s32 %s19, 1
      %s27 = ssub.s32 %s19, %s26
      %p28 = scmp.eq.s32.totalorder %s27, 0
      %s30 = sadd.s32 %s29, 1
      %s31 = scalar_select %p28, %s29, %s30
      %p34 = pneg %p28
      %p35 = scmp.eq.s32.totalorder %s19, 1
      %p36 = por %p34, %p35
      %p37 = scmp.ne.s32.totalorder %s29, %s32
      %p38 = scmp.eq.s32.totalorder %s19, 0
      %p39 = por %p37, %p38
      %p40 = scmp.ne.s32.totalorder %s29, %s32
      %p41 = scmp.eq.s32.totalorder %s24, 1
      %p42 = por %p40, %p41
      %p43 = scmp.ne.s32.totalorder %s32, %s33
      %p44 = scmp.eq.s32.totalorder %s24, 0
      %p45 = por %p43, %p44
      %p46 = scmp.ne.s32.totalorder %s32, %s33
      %p47 = scmp.eq.s32.totalorder %s25, 1
      %p48 = por %p46, %p47
      %p50 = scmp.ne.s32.totalorder %s33, %s49
      %p51 = scmp.eq.s32.totalorder %s25, 0
      %p52 = por %p50, %p51
      %s54 = sadd.s32 %s53, 1
      %p57 = scmp.eq.s32.totalorder %s19, 1
      %p58 = scmp.ne.s32.totalorder %s53, %s55
      %p59 = scmp.eq.s32.totalorder %s19, 0
      %p60 = por %p58, %p59
      %p61 = scmp.ne.s32.totalorder %s53, %s55
      %p62 = scmp.eq.s32.totalorder %s24, 1
      %p63 = por %p61, %p62
      %p64 = scmp.ne.s32.totalorder %s55, %s56
      %p65 = scmp.eq.s32.totalorder %s24, 0
      %p66 = por %p64, %p65
      %p67 = scmp.ne.s32.totalorder %s55, %s56
      %p68 = scmp.eq.s32.totalorder %s25, 1
      %p69 = por %p67, %p68
      %p71 = scmp.ne.s32.totalorder %s56, %s70
      %p72 = scmp.eq.s32.totalorder %s25, 0
      %p73 = por %p71, %p72
      %s74 = ssub.s32 %s19, %s26
      %p75 = scmp.eq.s32.totalorder %s74, 0
      %s77 = sadd.s32 %s76, 1
      %s78 = scalar_select %p75, %s76, %s77
      %p81 = pneg %p75
      %p82 = scmp.eq.s32.totalorder %s19, 1
      %p83 = por %p81, %p82
      %p84 = scmp.ne.s32.totalorder %s76, %s79
      %p85 = scmp.eq.s32.totalorder %s19, 0
      %p86 = por %p84, %p85
      %p87 = scmp.ne.s32.totalorder %s76, %s79
      %p88 = scmp.eq.s32.totalorder %s24, 1
      %p89 = por %p87, %p88
      %p90 = scmp.ne.s32.totalorder %s79, %s80
      %p91 = scmp.eq.s32.totalorder %s24, 0
      %p92 = por %p90, %p91
      %p93 = scmp.ne.s32.totalorder %s79, %s80
      %p94 = scmp.eq.s32.totalorder %s25, 1
      %p95 = por %p93, %p94
      %p97 = scmp.ne.s32.totalorder %s80, %s96
      %p98 = scmp.eq.s32.totalorder %s25, 0
      %p99 = por %p97, %p98
      %p100 = scmp.le.s32.totalorder 1, %s19
      %p101 = scmp.lt.s32.totalorder %s19, 3
      %p102 = pnand %p100, %p101
      %p103 = pneg %p102
      // Predicated region
      $region9: #{tpu_custom_call.1} parent=5 // pred_check
        _
      $region10: #{tpu_custom_call.1} parent=5 // pred_check_branch
        %105 = sbr.rel (%p102) target = $region12
      $region11: #{tpu_custom_call.1} parent=5 // pred_region
        %s106 = ssub.s32 %s19, 1
        // Predicated region
        $region13: #{tpu_custom_call.1} parent=11 // pred_check
          %p107 = pneg %p66
        $region14: #{tpu_custom_call.1} parent=11 // pred_check_branch
          %109 = sbr.rel (%p107) target = $region16
        $region15: #{tpu_custom_call.1} parent=11 // pred_region
          _
        $region16: #{tpu_custom_call.1} parent=11 // pred_fallthru
          _
      $region12: #{tpu_custom_call.1} parent=5 // pred_fallthru
        _
      %p110 = scmp.lt.s32.totalorder %s19, 2
      // Predicated region
      $region17: #{tpu_custom_call.1} parent=5 // pred_check
        %p111 = pneg %p110
      $region18: #{tpu_custom_call.1} parent=5 // pred_check_branch
        %113 = sbr.rel (%p111) target = $region20
      $region19: #{tpu_custom_call.1} parent=5 // pred_region
        // Predicated region
        $region21: #{tpu_custom_call.1} parent=19 // pred_check
          %p114 = pneg %p39
        $region22: #{tpu_custom_call.1} parent=19 // pred_check_branch
          %116 = sbr.rel (%p114) target = $region24
        $region23: #{tpu_custom_call.1} parent=19 // pred_region
          %p117 = scmp.lt.s32.totalorder %s19, 1
          %s118 = scalar_select %p117, %s19, 1
          %s119 = smul.addr %s118, 8
          %s120 = scalar_lea.vmem %s2, %s119
        $region24: #{tpu_custom_call.1} parent=19 // pred_fallthru
          _
      $region20: #{tpu_custom_call.1} parent=5 // pred_fallthru
        _
      %p121 = scmp.le.s32.totalorder 1, %s19
      %p122 = scmp.lt.s32.totalorder %s19, 3
      %p123 = pnand %p121, %p122
      %p124 = pneg %p123
      // Predicated region
      $region25: #{tpu_custom_call.1} parent=5 // pred_check
        _
      $region26: #{tpu_custom_call.1} parent=5 // pred_check_branch
        %126 = sbr.rel (%p123) target = $region28
      $region27: #{tpu_custom_call.1} parent=5 // pred_region
        %s127 = ssub.s32 %s19, 1
        %p128 = scmp.lt.s32.totalorder %s24, 1
        %s129 = scalar_select %p128, %s24, 1
        %s130 = smul.addr %s129, 8
        %s131 = scalar_lea.vmem %s2, %s130
        %p132 = pneg %p45
        %p133 = pneg %p42
        %p134 = pneg %p66
        %p135 = pneg %p63
        %p136 = pneg %p92
        %p137 = pneg %p89
        %s138 = sand.u32 %s79, 1
        %s139 = scalar_lea.sflag [#allocation7], %s138
        %s140 = sand.u32 %s79, 1
        %s141 = smul.addr %s140, 8
        %s142 = scalar_lea.vmem [#allocation6], %s141
        %p143 = scmp.lt.s32.totalorder %s24, 1
        %s144 = scalar_select %p143, %s24, 1
        %s145 = smul.addr %s144, 8
        %s146 = scalar_lea.vmem %s2, %s145
        %s147 = smul.u32 %s24, 8
        %s148 = sld [smem:[#allocation5 + %s147]]
        %s149 = scalar_lea.vmem %s1, %s148
        %p151 = scmp.lt.u32.totalorder 1, 8
        %p152 = pneg %p151
        // Predicated region
        $region29: #{tpu_custom_call.1} parent=27 // pred_check
          _
        $region30: #{tpu_custom_call.1} parent=27 // pred_check_branch
          %154 = sbr.rel (%p151) target = $region32
        $region31: #{tpu_custom_call.1} parent=27 // pred_region
          %s169 = sand.u32 1, 7
          %p170 = scmp.eq.s32.totalorder %s169, 0
          %p171 = pneg %p170
          // Predicated region
          $region44: #{tpu_custom_call.1} parent=31 // pred_check
            _
          $region45: #{tpu_custom_call.1} parent=31 // pred_check_branch
            %173 = sbr.rel (%p170) target = $region47
          $region46: #{tpu_custom_call.1} parent=31 // pred_region
            %s174 = sand.u32 1, 7
            %s175 = ssub.s32 1, %s174
            %s176 = scalar_lea.vmem %s149, %s175
            %s177 = ssub.s32 1, %s174
            %s178 = scalar_lea.vmem [#allocation2], %s177
            %s179 = sshllo.u32 0, %s174
            loop: start=0, step=1, limit=1
            $region48: #{tpu_custom_call.1} parent=46 // loop_pre_header
              _
            $region49: #{tpu_custom_call.1} parent=46 // loop_header
              %s181 = sphi 0, %s185
              %p182 = scmp.ge.s32.totalorder %s181, 1
              %s186 = sphi %s176, %s176
              %s187 = sphi %s178, %s178
            $region50: #{tpu_custom_call.1} parent=46 // loop_header_branch
              %184 = sbr.rel (%p182) target = $region54
            $region51: #{tpu_custom_call.1} parent=46 // loop_body
              %v188 = vld [vmem:[%s186] sm:%s179]
              %189 = vst [vmem:[%s187] sm:%s179] %v188
            $region52: #{tpu_custom_call.1} parent=46 // loop_footer
              %s185 = sadd.s32 1, %s181
            $region53: #{tpu_custom_call.1} parent=46 // loop_footer_branch
              %180 = sbr.rel target = $region49
            $region54: #{tpu_custom_call.1} parent=46 // loop_exit
              _
          $region47: #{tpu_custom_call.1} parent=31 // pred_fallthru
            _
        $region32: #{tpu_custom_call.1} parent=27 // pred_fallthru
          _
        // Predicated region
        $region33: #{tpu_custom_call.1} parent=27 // pred_check
          %p155 = pneg %p151
        $region34: #{tpu_custom_call.1} parent=27 // pred_check_branch
          %157 = sbr.rel (%p155) target = $region36
        $region35: #{tpu_custom_call.1} parent=27 // pred_region
          %s158 = sshllo.u32 0, 1
          loop: start=0, step=1, limit=1
          $region37: #{tpu_custom_call.1} parent=35 // loop_pre_header
            _
          $region38: #{tpu_custom_call.1} parent=35 // loop_header
            %s160 = sphi 0, %s164
            %p161 = scmp.ge.s32.totalorder %s160, 1
            %s165 = sphi %s149, %s149
            %s166 = sphi [#allocation2], [#allocation2]
          $region39: #{tpu_custom_call.1} parent=35 // loop_header_branch
            %163 = sbr.rel (%p161) target = $region43
          $region40: #{tpu_custom_call.1} parent=35 // loop_body
            %v167 = vld [vmem:[%s165] sm:%s158]
            %168 = vst [vmem:[%s166] sm:%s158] %v167
          $region41: #{tpu_custom_call.1} parent=35 // loop_footer
            %s164 = sadd.s32 1, %s160
          $region42: #{tpu_custom_call.1} parent=35 // loop_footer_branch
            %159 = sbr.rel target = $region38
          $region43: #{tpu_custom_call.1} parent=35 // loop_exit
            _
        $region36: #{tpu_custom_call.1} parent=27 // pred_fallthru
          _
        // Predicated region
        $region55: #{tpu_custom_call.1} parent=27 // pred_check
          _
        $region56: #{tpu_custom_call.1} parent=27 // pred_check_branch
          %192 = sbr.rel (0) target = $region58
        $region57: #{tpu_custom_call.1} parent=27 // pred_region
          %193 = vsyncadd [#allocation3], 16
        $region58: #{tpu_custom_call.1} parent=27 // pred_fallthru
          _
        %s194 = sadd.s32 %s147, 1
        %s195 = sld [smem:[#allocation5 + %s194]]
        %s196 = scalar_lea.vmem %s1, %s195
        %s197 = scalar_lea.vmem [#allocation2], 1
        %s198 = scalar_lea.sflag [#allocation3], 1
        %p200 = scmp.lt.u32.totalorder 1, 8
        %p201 = pneg %p200
        // Predicated region
        $region59: #{tpu_custom_call.1} parent=27 // pred_check
          _
        $region60: #{tpu_custom_call.1} parent=27 // pred_check_branch
          %203 = sbr.rel (%p200) target = $region62
        $region61: #{tpu_custom_call.1} parent=27 // pred_region
          %s218 = sand.u32 1, 7
          %p219 = scmp.eq.s32.totalorder %s218, 0
          %p220 = pneg %p219
          // Predicated region
          $region74: #{tpu_custom_call.1} parent=61 // pred_check
            _
          $region75: #{tpu_custom_call.1} parent=61 // pred_check_branch
            %222 = sbr.rel (%p219) target = $region77
          $region76: #{tpu_custom_call.1} parent=61 // pred_region
            %s223 = sand.u32 1, 7
            %s224 = ssub.s32 1, %s223
            %s225 = scalar_lea.vmem %s196, %s224
            %s226 = ssub.s32 1, %s223
            %s227 = scalar_lea.vmem %s197, %s226 [#allocation2]
            %s228 = sshllo.u32 0, %s223
            loop: start=0, step=1, limit=1
            $region78: #{tpu_custom_call.1} parent=76 // loop_pre_header
              _
            $region79: #{tpu_custom_call.1} parent=76 // loop_header
              %s230 = sphi 0, %s234
              %p231 = scmp.ge.s32.totalorder %s230, 1
              %s235 = sphi %s225, %s225
              %s236 = sphi %s227, %s227
            $region80: #{tpu_custom_call.1} parent=76 // loop_header_branch
              %233 = sbr.rel (%p231) target = $region84
            $region81: #{tpu_custom_call.1} parent=76 // loop_body
              %v237 = vld [vmem:[%s235] sm:%s228]
              %238 = vst [vmem:[%s236] sm:%s228] %v237
            $region82: #{tpu_custom_call.1} parent=76 // loop_footer
              %s234 = sadd.s32 1, %s230
            $region83: #{tpu_custom_call.1} parent=76 // loop_footer_branch
              %229 = sbr.rel target = $region79
            $region84: #{tpu_custom_call.1} parent=76 // loop_exit
              _
          $region77: #{tpu_custom_call.1} parent=61 // pred_fallthru
            _
        $region62: #{tpu_custom_call.1} parent=27 // pred_fallthru
          _
        // Predicated region
        $region63: #{tpu_custom_call.1} parent=27 // pred_check
          %p204 = pneg %p200
        $region64: #{tpu_custom_call.1} parent=27 // pred_check_branch
          %206 = sbr.rel (%p204) target = $region66
        $region65: #{tpu_custom_call.1} parent=27 // pred_region
          %s207 = sshllo.u32 0, 1
          loop: start=0, step=1, limit=1
          $region67: #{tpu_custom_call.1} parent=65 // loop_pre_header
            _
          $region68: #{tpu_custom_call.1} parent=65 // loop_header
            %s209 = sphi 0, %s213
            %p210 = scmp.ge.s32.totalorder %s209, 1
            %s214 = sphi %s196, %s196
            %s215 = sphi %s197, %s197
          $region69: #{tpu_custom_call.1} parent=65 // loop_header_branch
            %212 = sbr.rel (%p210) target = $region73
          $region70: #{tpu_custom_call.1} parent=65 // loop_body
            %v216 = vld [vmem:[%s214] sm:%s207]
            %217 = vst [vmem:[%s215] sm:%s207] %v216
          $region71: #{tpu_custom_call.1} parent=65 // loop_footer
            %s213 = sadd.s32 1, %s209
          $region72: #{tpu_custom_call.1} parent=65 // loop_footer_branch
            %208 = sbr.rel target = $region68
          $region73: #{tpu_custom_call.1} parent=65 // loop_exit
            _
        $region66: #{tpu_custom_call.1} parent=27 // pred_fallthru
          _
        // Predicated region
        $region85: #{tpu_custom_call.1} parent=27 // pred_check
          _
        $region86: #{tpu_custom_call.1} parent=27 // pred_check_branch
          %241 = sbr.rel (0) target = $region88
        $region87: #{tpu_custom_call.1} parent=27 // pred_region
          %242 = vsyncadd %s198, 16
        $region88: #{tpu_custom_call.1} parent=27 // pred_fallthru
          _
        %s243 = sadd.s32 %s147, 2
        %s244 = sld [smem:[#allocation5 + %s243]]
        %s245 = scalar_lea.vmem %s1, %s244
        %s246 = scalar_lea.vmem [#allocation2], 2
        %s247 = scalar_lea.sflag [#allocation3], 2
        %p249 = scmp.lt.u32.totalorder 1, 8
        %p250 = pneg %p249
        // Predicated region
        $region89: #{tpu_custom_call.1} parent=27 // pred_check
          _
        $region90: #{tpu_custom_call.1} parent=27 // pred_check_branch
          %252 = sbr.rel (%p249) target = $region92
        $region91: #{tpu_custom_call.1} parent=27 // pred_region
          %s267 = sand.u32 1, 7
          %p268 = scmp.eq.s32.totalorder %s267, 0
          %p269 = pneg %p268
          // Predicated region
          $region104: #{tpu_custom_call.1} parent=91 // pred_check
            _
          $region105: #{tpu_custom_call.1} parent=91 // pred_check_branch
            %271 = sbr.rel (%p268) target = $region107
          $region106: #{tpu_custom_call.1} parent=91 // pred_region
            %s272 = sand.u32 1, 7
            %s273 = ssub.s32 1, %s272
            %s274 = scalar_lea.vmem %s245, %s273
            %s275 = ssub.s32 1, %s272
            %s276 = scalar_lea.vmem %s246, %s275 [#allocation2]
            %s277 = sshllo.u32 0, %s272
            loop: start=0, step=1, limit=1
            $region108: #{tpu_custom_call.1} parent=106 // loop_pre_header
              _
            $region109: #{tpu_custom_call.1} parent=106 // loop_header
              %s279 = sphi 0, %s283
              %p280 = scmp.ge.s32.totalorder %s279, 1
              %s284 = sphi %s274, %s274
              %s285 = sphi %s276, %s276
            $region110: #{tpu_custom_call.1} parent=106 // loop_header_branch
              %282 = sbr.rel (%p280) target = $region114
            $region111: #{tpu_custom_call.1} parent=106 // loop_body
              %v286 = vld [vmem:[%s284] sm:%s277]
              %287 = vst [vmem:[%s285] sm:%s277] %v286
            $region112: #{tpu_custom_call.1} parent=106 // loop_footer
              %s283 = sadd.s32 1, %s279
            $region113: #{tpu_custom_call.1} parent=106 // loop_footer_branch
              %278 = sbr.rel target = $region109
            $region114: #{tpu_custom_call.1} parent=106 // loop_exit
              _
          $region107: #{tpu_custom_call.1} parent=91 // pred_fallthru
            _
        $region92: #{tpu_custom_call.1} parent=27 // pred_fallthru
          _
        // Predicated region
        $region93: #{tpu_custom_call.1} parent=27 // pred_check
          %p253 = pneg %p249
        $region94: #{tpu_custom_call.1} parent=27 // pred_check_branch
          %255 = sbr.rel (%p253) target = $region96
        $region95: #{tpu_custom_call.1} parent=27 // pred_region
          %s256 = sshllo.u32 0, 1
          loop: start=0, step=1, limit=1
          $region97: #{tpu_custom_call.1} parent=95 // loop_pre_header
            _
          $region98: #{tpu_custom_call.1} parent=95 // loop_header
            %s258 = sphi 0, %s262
            %p259 = scmp.ge.s32.totalorder %s258, 1
            %s263 = sphi %s245, %s245
            %s264 = sphi %s246, %s246
          $region99: #{tpu_custom_call.1} parent=95 // loop_header_branch
            %261 = sbr.rel (%p259) target = $region103
          $region100: #{tpu_custom_call.1} parent=95 // loop_body
            %v265 = vld [vmem:[%s263] sm:%s256]
            %266 = vst [vmem:[%s264] sm:%s256] %v265
          $region101: #{tpu_custom_call.1} parent=95 // loop_footer
            %s262 = sadd.s32 1, %s258
          $region102: #{tpu_custom_call.1} parent=95 // loop_footer_branch
            %257 = sbr.rel target = $region98
          $region103: #{tpu_custom_call.1} parent=95 // loop_exit
            _
        $region96: #{tpu_custom_call.1} parent=27 // pred_fallthru
          _
        // Predicated region
        $region115: #{tpu_custom_call.1} parent=27 // pred_check
          _
        $region116: #{tpu_custom_call.1} parent=27 // pred_check_branch
          %290 = sbr.rel (0) target = $region118
        $region117: #{tpu_custom_call.1} parent=27 // pred_region
          %291 = vsyncadd %s247, 16
        $region118: #{tpu_custom_call.1} parent=27 // pred_fallthru
          _
        %s292 = sadd.s32 %s147, 3
        %s293 = sld [smem:[#allocation5 + %s292]]
        %s294 = scalar_lea.vmem %s1, %s293
        %s295 = scalar_lea.vmem [#allocation2], 3
        %s296 = scalar_lea.sflag [#allocation3], 3
        %p298 = scmp.lt.u32.totalorder 1, 8
        %p299 = pneg %p298
        // Predicated region
        $region119: #{tpu_custom_call.1} parent=27 // pred_check
          _
        $region120: #{tpu_custom_call.1} parent=27 // pred_check_branch
          %301 = sbr.rel (%p298) target = $region122
        $region121: #{tpu_custom_call.1} parent=27 // pred_region
          %s316 = sand.u32 1, 7
          %p317 = scmp.eq.s32.totalorder %s316, 0
          %p318 = pneg %p317
          // Predicated region
          $region134: #{tpu_custom_call.1} parent=121 // pred_check
            _
          $region135: #{tpu_custom_call.1} parent=121 // pred_check_branch
            %320 = sbr.rel (%p317) target = $region137
          $region136: #{tpu_custom_call.1} parent=121 // pred_region
            %s321 = sand.u32 1, 7
            %s322 = ssub.s32 1, %s321
            %s323 = scalar_lea.vmem %s294, %s322
            %s324 = ssub.s32 1, %s321
            %s325 = scalar_lea.vmem %s295, %s324 [#allocation2]
            %s326 = sshllo.u32 0, %s321
            loop: start=0, step=1, limit=1
            $region138: #{tpu_custom_call.1} parent=136 // loop_pre_header
              _
            $region139: #{tpu_custom_call.1} parent=136 // loop_header
              %s328 = sphi 0, %s332
              %p329 = scmp.ge.s32.totalorder %s328, 1
              %s333 = sphi %s323, %s323
              %s334 = sphi %s325, %s325
            $region140: #{tpu_custom_call.1} parent=136 // loop_header_branch
              %331 = sbr.rel (%p329) target = $region144
            $region141: #{tpu_custom_call.1} parent=136 // loop_body
              %v335 = vld [vmem:[%s333] sm:%s326]
              %336 = vst [vmem:[%s334] sm:%s326] %v335
            $region142: #{tpu_custom_call.1} parent=136 // loop_footer
              %s332 = sadd.s32 1, %s328
            $region143: #{tpu_custom_call.1} parent=136 // loop_footer_branch
              %327 = sbr.rel target = $region139
            $region144: #{tpu_custom_call.1} parent=136 // loop_exit
              _
          $region137: #{tpu_custom_call.1} parent=121 // pred_fallthru
            _
        $region122: #{tpu_custom_call.1} parent=27 // pred_fallthru
          _
        // Predicated region
        $region123: #{tpu_custom_call.1} parent=27 // pred_check
          %p302 = pneg %p298
        $region124: #{tpu_custom_call.1} parent=27 // pred_check_branch
          %304 = sbr.rel (%p302) target = $region126
        $region125: #{tpu_custom_call.1} parent=27 // pred_region
          %s305 = sshllo.u32 0, 1
          loop: start=0, step=1, limit=1
          $region127: #{tpu_custom_call.1} parent=125 // loop_pre_header
            _
          $region128: #{tpu_custom_call.1} parent=125 // loop_header
            %s307 = sphi 0, %s311
            %p308 = scmp.ge.s32.totalorder %s307, 1
            %s312 = sphi %s294, %s294
            %s313 = sphi %s295, %s295
          $region129: #{tpu_custom_call.1} parent=125 // loop_header_branch
            %310 = sbr.rel (%p308) target = $region133
          $region130: #{tpu_custom_call.1} parent=125 // loop_body
            %v314 = vld [vmem:[%s312] sm:%s305]
            %315 = vst [vmem:[%s313] sm:%s305] %v314
          $region131: #{tpu_custom_call.1} parent=125 // loop_footer
            %s311 = sadd.s32 1, %s307
          $region132: #{tpu_custom_call.1} parent=125 // loop_footer_branch
            %306 = sbr.rel target = $region128
          $region133: #{tpu_custom_call.1} parent=125 // loop_exit
            _
        $region126: #{tpu_custom_call.1} parent=27 // pred_fallthru
          _
        // Predicated region
        $region145: #{tpu_custom_call.1} parent=27 // pred_check
          _
        $region146: #{tpu_custom_call.1} parent=27 // pred_check_branch
          %339 = sbr.rel (0) target = $region148
        $region147: #{tpu_custom_call.1} parent=27 // pred_region
          %340 = vsyncadd %s296, 16
        $region148: #{tpu_custom_call.1} parent=27 // pred_fallthru
          _
        %s341 = sadd.s32 %s147, 4
        %s342 = sld [smem:[#allocation5 + %s341]]
        %s343 = scalar_lea.vmem %s1, %s342
        %s344 = scalar_lea.vmem [#allocation2], 4
        %s345 = scalar_lea.sflag [#allocation3], 4
        %p347 = scmp.lt.u32.totalorder 1, 8
        %p348 = pneg %p347
        // Predicated region
        $region149: #{tpu_custom_call.1} parent=27 // pred_check
          _
        $region150: #{tpu_custom_call.1} parent=27 // pred_check_branch
          %350 = sbr.rel (%p347) target = $region152
        $region151: #{tpu_custom_call.1} parent=27 // pred_region
          %s365 = sand.u32 1, 7
          %p366 = scmp.eq.s32.totalorder %s365, 0
          %p367 = pneg %p366
          // Predicated region
          $region164: #{tpu_custom_call.1} parent=151 // pred_check
            _
          $region165: #{tpu_custom_call.1} parent=151 // pred_check_branch
            %369 = sbr.rel (%p366) target = $region167
          $region166: #{tpu_custom_call.1} parent=151 // pred_region
            %s370 = sand.u32 1, 7
            %s371 = ssub.s32 1, %s370
            %s372 = scalar_lea.vmem %s343, %s371
            %s373 = ssub.s32 1, %s370
            %s374 = scalar_lea.vmem %s344, %s373 [#allocation2]
            %s375 = sshllo.u32 0, %s370
            loop: start=0, step=1, limit=1
            $region168: #{tpu_custom_call.1} parent=166 // loop_pre_header
              _
            $region169: #{tpu_custom_call.1} parent=166 // loop_header
              %s377 = sphi 0, %s381
              %p378 = scmp.ge.s32.totalorder %s377, 1
              %s382 = sphi %s372, %s372
              %s383 = sphi %s374, %s374
            $region170: #{tpu_custom_call.1} parent=166 // loop_header_branch
              %380 = sbr.rel (%p378) target = $region174
            $region171: #{tpu_custom_call.1} parent=166 // loop_body
              %v384 = vld [vmem:[%s382] sm:%s375]
              %385 = vst [vmem:[%s383] sm:%s375] %v384
            $region172: #{tpu_custom_call.1} parent=166 // loop_footer
              %s381 = sadd.s32 1, %s377
            $region173: #{tpu_custom_call.1} parent=166 // loop_footer_branch
              %376 = sbr.rel target = $region169
            $region174: #{tpu_custom_call.1} parent=166 // loop_exit
              _
          $region167: #{tpu_custom_call.1} parent=151 // pred_fallthru
            _
        $region152: #{tpu_custom_call.1} parent=27 // pred_fallthru
          _
        // Predicated region
        $region153: #{tpu_custom_call.1} parent=27 // pred_check
          %p351 = pneg %p347
        $region154: #{tpu_custom_call.1} parent=27 // pred_check_branch
          %353 = sbr.rel (%p351) target = $region156
        $region155: #{tpu_custom_call.1} parent=27 // pred_region
          %s354 = sshllo.u32 0, 1
          loop: start=0, step=1, limit=1
          $region157: #{tpu_custom_call.1} parent=155 // loop_pre_header
            _
          $region158: #{tpu_custom_call.1} parent=155 // loop_header
            %s356 = sphi 0, %s360
            %p357 = scmp.ge.s32.totalorder %s356, 1
            %s361 = sphi %s343, %s343
            %s362 = sphi %s344, %s344
          $region159: #{tpu_custom_call.1} parent=155 // loop_header_branch
            %359 = sbr.rel (%p357) target = $region163
          $region160: #{tpu_custom_call.1} parent=155 // loop_body
            %v363 = vld [vmem:[%s361] sm:%s354]
            %364 = vst [vmem:[%s362] sm:%s354] %v363
          $region161: #{tpu_custom_call.1} parent=155 // loop_footer
            %s360 = sadd.s32 1, %s356
          $region162: #{tpu_custom_call.1} parent=155 // loop_footer_branch
            %355 = sbr.rel target = $region158
          $region163: #{tpu_custom_call.1} parent=155 // loop_exit
            _
        $region156: #{tpu_custom_call.1} parent=27 // pred_fallthru
          _
        // Predicated region
        $region175: #{tpu_custom_call.1} parent=27 // pred_check
          _
        $region176: #{tpu_custom_call.1} parent=27 // pred_check_branch
          %388 = sbr.rel (0) target = $region178
        $region177: #{tpu_custom_call.1} parent=27 // pred_region
          %389 = vsyncadd %s345, 16
        $region178: #{tpu_custom_call.1} parent=27 // pred_fallthru
          _
        %s390 = sadd.s32 %s147, 5
        %s391 = sld [smem:[#allocation5 + %s390]]
        %s392 = scalar_lea.vmem %s1, %s391
        %s393 = scalar_lea.vmem [#allocation2], 5
        %s394 = scalar_lea.sflag [#allocation3], 5
        %p396 = scmp.lt.u32.totalorder 1, 8
        %p397 = pneg %p396
        // Predicated region
        $region179: #{tpu_custom_call.1} parent=27 // pred_check
          _
        $region180: #{tpu_custom_call.1} parent=27 // pred_check_branch
          %399 = sbr.rel (%p396) target = $region182
        $region181: #{tpu_custom_call.1} parent=27 // pred_region
          %s414 = sand.u32 1, 7
          %p415 = scmp.eq.s32.totalorder %s414, 0
          %p416 = pneg %p415
          // Predicated region
          $region194: #{tpu_custom_call.1} parent=181 // pred_check
            _
          $region195: #{tpu_custom_call.1} parent=181 // pred_check_branch
            %418 = sbr.rel (%p415) target = $region197
          $region196: #{tpu_custom_call.1} parent=181 // pred_region
            %s419 = sand.u32 1, 7
            %s420 = ssub.s32 1, %s419
            %s421 = scalar_lea.vmem %s392, %s420
            %s422 = ssub.s32 1, %s419
            %s423 = scalar_lea.vmem %s393, %s422 [#allocation2]
            %s424 = sshllo.u32 0, %s419
            loop: start=0, step=1, limit=1
            $region198: #{tpu_custom_call.1} parent=196 // loop_pre_header
              _
            $region199: #{tpu_custom_call.1} parent=196 // loop_header
              %s426 = sphi 0, %s430
              %p427 = scmp.ge.s32.totalorder %s426, 1
              %s431 = sphi %s421, %s421
              %s432 = sphi %s423, %s423
            $region200: #{tpu_custom_call.1} parent=196 // loop_header_branch
              %429 = sbr.rel (%p427) target = $region204
            $region201: #{tpu_custom_call.1} parent=196 // loop_body
              %v433 = vld [vmem:[%s431] sm:%s424]
              %434 = vst [vmem:[%s432] sm:%s424] %v433
            $region202: #{tpu_custom_call.1} parent=196 // loop_footer
              %s430 = sadd.s32 1, %s426
            $region203: #{tpu_custom_call.1} parent=196 // loop_footer_branch
              %425 = sbr.rel target = $region199
            $region204: #{tpu_custom_call.1} parent=196 // loop_exit
              _
          $region197: #{tpu_custom_call.1} parent=181 // pred_fallthru
            _
        $region182: #{tpu_custom_call.1} parent=27 // pred_fallthru
          _
        // Predicated region
        $region183: #{tpu_custom_call.1} parent=27 // pred_check
          %p400 = pneg %p396
        $region184: #{tpu_custom_call.1} parent=27 // pred_check_branch
          %402 = sbr.rel (%p400) target = $region186
        $region185: #{tpu_custom_call.1} parent=27 // pred_region
          %s403 = sshllo.u32 0, 1
          loop: start=0, step=1, limit=1
          $region187: #{tpu_custom_call.1} parent=185 // loop_pre_header
            _
          $region188: #{tpu_custom_call.1} parent=185 // loop_header
            %s405 = sphi 0, %s409
            %p406 = scmp.ge.s32.totalorder %s405, 1
            %s410 = sphi %s392, %s392
            %s411 = sphi %s393, %s393
          $region189: #{tpu_custom_call.1} parent=185 // loop_header_branch
            %408 = sbr.rel (%p406) target = $region193
          $region190: #{tpu_custom_call.1} parent=185 // loop_body
            %v412 = vld [vmem:[%s410] sm:%s403]
            %413 = vst [vmem:[%s411] sm:%s403] %v412
          $region191: #{tpu_custom_call.1} parent=185 // loop_footer
            %s409 = sadd.s32 1, %s405
          $region192: #{tpu_custom_call.1} parent=185 // loop_footer_branch
            %404 = sbr.rel target = $region188
          $region193: #{tpu_custom_call.1} parent=185 // loop_exit
            _
        $region186: #{tpu_custom_call.1} parent=27 // pred_fallthru
          _
        // Predicated region
        $region205: #{tpu_custom_call.1} parent=27 // pred_check
          _
        $region206: #{tpu_custom_call.1} parent=27 // pred_check_branch
          %437 = sbr.rel (0) target = $region208
        $region207: #{tpu_custom_call.1} parent=27 // pred_region
          %438 = vsyncadd %s394, 16
        $region208: #{tpu_custom_call.1} parent=27 // pred_fallthru
          _
        %s439 = sadd.s32 %s147, 6
        %s440 = sld [smem:[#allocation5 + %s439]]
        %s441 = scalar_lea.vmem %s1, %s440
        %s442 = scalar_lea.vmem [#allocation2], 6
        %s443 = scalar_lea.sflag [#allocation3], 6
        %p445 = scmp.lt.u32.totalorder 1, 8
        %p446 = pneg %p445
        // Predicated region
        $region209: #{tpu_custom_call.1} parent=27 // pred_check
          _
        $region210: #{tpu_custom_call.1} parent=27 // pred_check_branch
          %448 = sbr.rel (%p445) target = $region212
        $region211: #{tpu_custom_call.1} parent=27 // pred_region
          %s463 = sand.u32 1, 7
          %p464 = scmp.eq.s32.totalorder %s463, 0
          %p465 = pneg %p464
          // Predicated region
          $region224: #{tpu_custom_call.1} parent=211 // pred_check
            _
          $region225: #{tpu_custom_call.1} parent=211 // pred_check_branch
            %467 = sbr.rel (%p464) target = $region227
          $region226: #{tpu_custom_call.1} parent=211 // pred_region
            %s468 = sand.u32 1, 7
            %s469 = ssub.s32 1, %s468
            %s470 = scalar_lea.vmem %s441, %s469
            %s471 = ssub.s32 1, %s468
            %s472 = scalar_lea.vmem %s442, %s471 [#allocation2]
            %s473 = sshllo.u32 0, %s468
            loop: start=0, step=1, limit=1
            $region228: #{tpu_custom_call.1} parent=226 // loop_pre_header
              _
            $region229: #{tpu_custom_call.1} parent=226 // loop_header
              %s475 = sphi 0, %s479
              %p476 = scmp.ge.s32.totalorder %s475, 1
              %s480 = sphi %s470, %s470
              %s481 = sphi %s472, %s472
            $region230: #{tpu_custom_call.1} parent=226 // loop_header_branch
              %478 = sbr.rel (%p476) target = $region234
            $region231: #{tpu_custom_call.1} parent=226 // loop_body
              %v482 = vld [vmem:[%s480] sm:%s473]
              %483 = vst [vmem:[%s481] sm:%s473] %v482
            $region232: #{tpu_custom_call.1} parent=226 // loop_footer
              %s479 = sadd.s32 1, %s475
            $region233: #{tpu_custom_call.1} parent=226 // loop_footer_branch
              %474 = sbr.rel target = $region229
            $region234: #{tpu_custom_call.1} parent=226 // loop_exit
              _
          $region227: #{tpu_custom_call.1} parent=211 // pred_fallthru
            _
        $region212: #{tpu_custom_call.1} parent=27 // pred_fallthru
          _
        // Predicated region
        $region213: #{tpu_custom_call.1} parent=27 // pred_check
          %p449 = pneg %p445
        $region214: #{tpu_custom_call.1} parent=27 // pred_check_branch
          %451 = sbr.rel (%p449) target = $region216
        $region215: #{tpu_custom_call.1} parent=27 // pred_region
          %s452 = sshllo.u32 0, 1
          loop: start=0, step=1, limit=1
          $region217: #{tpu_custom_call.1} parent=215 // loop_pre_header
            _
          $region218: #{tpu_custom_call.1} parent=215 // loop_header
            %s454 = sphi 0, %s458
            %p455 = scmp.ge.s32.totalorder %s454, 1
            %s459 = sphi %s441, %s441
            %s460 = sphi %s442, %s442
          $region219: #{tpu_custom_call.1} parent=215 // loop_header_branch
            %457 = sbr.rel (%p455) target = $region223
          $region220: #{tpu_custom_call.1} parent=215 // loop_body
            %v461 = vld [vmem:[%s459] sm:%s452]
            %462 = vst [vmem:[%s460] sm:%s452] %v461
          $region221: #{tpu_custom_call.1} parent=215 // loop_footer
            %s458 = sadd.s32 1, %s454
          $region222: #{tpu_custom_call.1} parent=215 // loop_footer_branch
            %453 = sbr.rel target = $region218
          $region223: #{tpu_custom_call.1} parent=215 // loop_exit
            _
        $region216: #{tpu_custom_call.1} parent=27 // pred_fallthru
          _
        // Predicated region
        $region235: #{tpu_custom_call.1} parent=27 // pred_check
          _
        $region236: #{tpu_custom_call.1} parent=27 // pred_check_branch
          %486 = sbr.rel (0) target = $region238
        $region237: #{tpu_custom_call.1} parent=27 // pred_region
          %487 = vsyncadd %s443, 16
        $region238: #{tpu_custom_call.1} parent=27 // pred_fallthru
          _
        %s488 = sadd.s32 %s147, 7
        %s489 = sld [smem:[#allocation5 + %s488]]
        %s490 = scalar_lea.vmem %s1, %s489
        %s491 = scalar_lea.vmem [#allocation2], 7
        %s492 = scalar_lea.sflag [#allocation3], 7
        %p494 = scmp.lt.u32.totalorder 1, 8
        %p495 = pneg %p494
        // Predicated region
        $region239: #{tpu_custom_call.1} parent=27 // pred_check
          _
        $region240: #{tpu_custom_call.1} parent=27 // pred_check_branch
          %497 = sbr.rel (%p494) target = $region242
        $region241: #{tpu_custom_call.1} parent=27 // pred_region
          %s512 = sand.u32 1, 7
          %p513 = scmp.eq.s32.totalorder %s512, 0
          %p514 = pneg %p513
          // Predicated region
          $region254: #{tpu_custom_call.1} parent=241 // pred_check
            _
          $region255: #{tpu_custom_call.1} parent=241 // pred_check_branch
            %516 = sbr.rel (%p513) target = $region257
          $region256: #{tpu_custom_call.1} parent=241 // pred_region
            %s517 = sand.u32 1, 7
            %s518 = ssub.s32 1, %s517
            %s519 = scalar_lea.vmem %s490, %s518
            %s520 = ssub.s32 1, %s517
            %s521 = scalar_lea.vmem %s491, %s520 [#allocation2]
            %s522 = sshllo.u32 0, %s517
            loop: start=0, step=1, limit=1
            $region258: #{tpu_custom_call.1} parent=256 // loop_pre_header
              _
            $region259: #{tpu_custom_call.1} parent=256 // loop_header
              %s524 = sphi 0, %s528
              %p525 = scmp.ge.s32.totalorder %s524, 1
              %s529 = sphi %s519, %s519
              %s530 = sphi %s521, %s521
            $region260: #{tpu_custom_call.1} parent=256 // loop_header_branch
              %527 = sbr.rel (%p525) target = $region264
            $region261: #{tpu_custom_call.1} parent=256 // loop_body
              %v531 = vld [vmem:[%s529] sm:%s522]
              %532 = vst [vmem:[%s530] sm:%s522] %v531
            $region262: #{tpu_custom_call.1} parent=256 // loop_footer
              %s528 = sadd.s32 1, %s524
            $region263: #{tpu_custom_call.1} parent=256 // loop_footer_branch
              %523 = sbr.rel target = $region259
            $region264: #{tpu_custom_call.1} parent=256 // loop_exit
              _
          $region257: #{tpu_custom_call.1} parent=241 // pred_fallthru
            _
        $region242: #{tpu_custom_call.1} parent=27 // pred_fallthru
          _
        // Predicated region
        $region243: #{tpu_custom_call.1} parent=27 // pred_check
          %p498 = pneg %p494
        $region244: #{tpu_custom_call.1} parent=27 // pred_check_branch
          %500 = sbr.rel (%p498) target = $region246
        $region245: #{tpu_custom_call.1} parent=27 // pred_region
          %s501 = sshllo.u32 0, 1
          loop: start=0, step=1, limit=1
          $region247: #{tpu_custom_call.1} parent=245 // loop_pre_header
            _
          $region248: #{tpu_custom_call.1} parent=245 // loop_header
            %s503 = sphi 0, %s507
            %p504 = scmp.ge.s32.totalorder %s503, 1
            %s508 = sphi %s490, %s490
            %s509 = sphi %s491, %s491
          $region249: #{tpu_custom_call.1} parent=245 // loop_header_branch
            %506 = sbr.rel (%p504) target = $region253
          $region250: #{tpu_custom_call.1} parent=245 // loop_body
            %v510 = vld [vmem:[%s508] sm:%s501]
            %511 = vst [vmem:[%s509] sm:%s501] %v510
          $region251: #{tpu_custom_call.1} parent=245 // loop_footer
            %s507 = sadd.s32 1, %s503
          $region252: #{tpu_custom_call.1} parent=245 // loop_footer_branch
            %502 = sbr.rel target = $region248
          $region253: #{tpu_custom_call.1} parent=245 // loop_exit
            _
        $region246: #{tpu_custom_call.1} parent=27 // pred_fallthru
          _
        // Predicated region
        $region265: #{tpu_custom_call.1} parent=27 // pred_check
          _
        $region266: #{tpu_custom_call.1} parent=27 // pred_check_branch
          %535 = sbr.rel (0) target = $region268
        $region267: #{tpu_custom_call.1} parent=27 // pred_region
          %536 = vsyncadd %s492, 16
        $region268: #{tpu_custom_call.1} parent=27 // pred_fallthru
          _
        %s537 = smul.u32 1, 1
        %s538 = sshll.u32 %s537, 4
        %539 = dma.done [#allocation3], %s538
        %s540 = sshll.u32 %s537, 4
        %541 = dma.done %s198, %s540
        %s542 = sshll.u32 %s537, 4
        %543 = dma.done %s247, %s542
        %s544 = sshll.u32 %s537, 4
        %545 = dma.done %s296, %s544
        %s546 = sshll.u32 %s537, 4
        %547 = dma.done %s345, %s546
        %s548 = sshll.u32 %s537, 4
        %549 = dma.done %s394, %s548
        %s550 = sshll.u32 %s537, 4
        %551 = dma.done %s443, %s550
        %s552 = sshll.u32 %s537, 4
        %553 = dma.done %s492, %s552
        %v554 = vld [vmem:[#allocation2] sm:$0xff]
        %v555 = vld [vmem:[%s146] sm:$0xff]
        %v556 = vmul.f32 %v555, 16.0
        %v557 = vld [vmem:[%s3] sm:$0x1]
        %559 = vset.pattern.permute.xlu0 0
        %560 = vperm.xlu0 %559, %v556
        %v561 = vpop.permute.xlu0 %560
        %v564 = vlaneseq
        %v565 = vshrl.u32 %v564, 7
        %v566 = vsub.s32 0, %v565
        %v567 = vrot.slane %v557, %v566
        %v569 = vmul.f32 %v561, %v567
        %v570 = vand.u32 2147483647, %v569
        %vm571 = vcmp.le.f32.partialorder %v570, 0.7853982
        %vm572 = vcmp.lt.s32.totalorder %v569, 0
        %v573 = vand.u32 %v569, 2139095040
        %v574 = vshrl.u32 %v573, 23
        %v575 = vsub.s32 %v574, 127
        %v576 = vand.u32 2147483647, %v569
        %v577 = vand.u32 %v576, 8388607
        %v578 = vor.u32 %v577, 8388608
        %v579 = vsub.s32 0, %v578
        %v580 = vadd.s32 %v575, 1
        %vm581 = vcmp.gt.s32.totalorder %v580, 0
        %v582 = vsel %vm581, %v580, 0
        %v583 = vshrl.u32 %v582, 5
        %v584 = vand.u32 %v582, 31
        %v585 = vsub.s32 32, %v584
        %v586 = vshrl.u32 683565275, %v585
        %v587 = vshll.u32 683565275, %v584
        %v588 = vshrl.u32 2475754826, %v585
        %v589 = vor.u32 %v587, %v588
        %v590 = vshll.u32 2475754826, %v584
        %v591 = vshrl.u32 2131351028, %v585
        %v592 = vor.u32 %v590, %v591
        %v593 = vshll.u32 2131351028, %v584
        %v594 = vshrl.u32 2102212464, %v585
        %v595 = vor.u32 %v593, %v594
        %v596 = vshll.u32 2102212464, %v584
        %v597 = vshrl.u32 920167782, %v585
        %v598 = vor.u32 %v596, %v597
        %v599 = vshll.u32 920167782, %v584
        %v600 = vshrl.u32 1326507024, %v585
        %v601 = vor.u32 %v599, %v600
        %vm602 = vcmp.lt.s32.totalorder %v583, 1
        %vm603 = vcmp.lt.s32.totalorder %v583, 2
        %vm604 = vcmp.lt.s32.totalorder %v583, 3
        %vm605 = vcmp.lt.s32.totalorder %v583, 4
        %v606 = vsel %vm602, %v586, %v589
        %v607 = vsel %vm605, %v595, 2102212464
        %v608 = vsel %vm604, %v592, %v607
        %v609 = vsel %vm603, %v606, %v608
        %v610 = vsel %vm602, %v589, %v592
        %v611 = vsel %vm605, %v598, 920167782
        %v612 = vsel %vm604, %v595, %v611
        %v613 = vsel %vm603, %v610, %v612
        %v614 = vsel %vm602, %v592, %v595
        %v615 = vsel %vm605, %v601, 1326507024
        %v616 = vsel %vm604, %v598, %v615
        %v617 = vsel %vm603, %v614, %v616
        %v618 = vshll.u32 %v578, 8
        %v619 = vmul.u32.u64.compose %v618, %v617
        %v620 = vextract.low.u32 %v619
        %v621 = vextract.high.u32 %v619
        %v622 = vmul.u32.u64.compose %v618, %v613
        %v623 = vextract.low.u32 %v622
        %v624 = vextract.high.u32 %v622
        %v625 = vmul.u32 %v618, %v609
        %v626 = vadd.s32 %v621, %v623
        %vm627 = vc.u32 %v621, %v623
        %v628 = vadd.s32 %v624, 1
        %v629 = vsel %vm627, %v628, %v624
        %v630 = vadd.s32 %v625, %v629
        %v631 = vadd.s32 %v630, 536870912
        %v632 = vshrl.u32 %v631, 30
        %v633 = vshll.u32 %v632, 30
        %v634 = vsub.s32 %v630, %v633
        %vm635 = vcmp.lt.s32.totalorder %v634, 0
        %v636 = vsub.s32 0, %v634
        %v637 = vsel %vm635, %v636, %v634
        %v638 = vclz %v637
        %v639 = vsub.s32 %v638, 2
        %vm640 = vcmp.gt.s32.totalorder 0, %v639
        %v641 = vsel %vm640, 0, %v639
        %v642 = vsub.s32 32, %v641
        %v643 = vshll.u32 %v634, %v641
        %v644 = vshrl.u32 %v626, %v642
        %v645 = vor.u32 %v643, %v644
        %v646 = vsub.s32 4294967266, %v641
        %v647 = vadd.s32 %v646, 127
        %v648 = vshll.u32 %v647, 23
        %v649 = vor.u32 4788187, %v648
        %v650 = vand.u32 2147483647, %v649
        %v652 = vcvt.s32.f32 %v645
        %v653 = vmul.f32 %v652, %v650
        %v654 = vxor.u32 %v653, 2147483648
        %v655 = vsel %vm572, %v654, %v653
        %v656 = vsub.s32 4, %v632
        %v657 = vsel %vm572, %v656, %v632
        %v658 = vsel %vm571, %v569, %v655
        %v659 = vsel %vm571, 0, %v657
        %v660 = vcosq.f32.pop %v658
        %v661 = vsinq.f32.pop %v658
        %vm662 = vweird.f32 %v569
        %v663 = vand.u32 %v659, 3
        %vm664 = vcmp.lt.s32.totalorder %v663, 2
        %vm665 = vcmp.eq.s32.totalorder %v663, 0
        %v666 = vxor.u32 %v661, 2147483648
        %v667 = vsel %vm665, %v660, %v666
        %vm668 = vcmp.eq.s32.totalorder %v663, 2
        %v669 = vxor.u32 %v660, 2147483648
        %v670 = vsel %vm668, %v669, %v661
        %v671 = vsel %vm664, %v667, %v670
        %v672 = vsel %vm662, nan, %v671
        %v673 = vmul.f32 %v672, 0.17677669
        %v674 = vand.u32 2147483647, %v569
        %vm675 = vcmp.le.f32.partialorder %v674, 0.7853982
        %vm676 = vcmp.lt.s32.totalorder %v569, 0
        %v677 = vand.u32 %v569, 2139095040
        %v678 = vshrl.u32 %v677, 23
        %v679 = vsub.s32 %v678, 127
        %v680 = vand.u32 2147483647, %v569
        %v681 = vand.u32 %v680, 8388607
        %v682 = vor.u32 %v681, 8388608
        %v683 = vsub.s32 0, %v682
        %v684 = vadd.s32 %v679, 1
        %vm685 = vcmp.gt.s32.totalorder %v684, 0
        %v686 = vsel %vm685, %v684, 0
        %v687 = vshrl.u32 %v686, 5
        %v688 = vand.u32 %v686, 31
        %v689 = vsub.s32 32, %v688
        %v690 = vshrl.u32 683565275, %v689
        %v691 = vshll.u32 683565275, %v688
        %v692 = vshrl.u32 2475754826, %v689
        %v693 = vor.u32 %v691, %v692
        %v694 = vshll.u32 2475754826, %v688
        %v695 = vshrl.u32 2131351028, %v689
        %v696 = vor.u32 %v694, %v695
        %v697 = vshll.u32 2131351028, %v688
        %v698 = vshrl.u32 2102212464, %v689
        %v699 = vor.u32 %v697, %v698
        %v700 = vshll.u32 2102212464, %v688
        %v701 = vshrl.u32 920167782, %v689
        %v702 = vor.u32 %v700, %v701
        %v703 = vshll.u32 920167782, %v688
        %v704 = vshrl.u32 1326507024, %v689
        %v705 = vor.u32 %v703, %v704
        %vm706 = vcmp.lt.s32.totalorder %v687, 1
        %vm707 = vcmp.lt.s32.totalorder %v687, 2
        %vm708 = vcmp.lt.s32.totalorder %v687, 3
        %vm709 = vcmp.lt.s32.totalorder %v687, 4
        %v710 = vsel %vm706, %v690, %v693
        %v711 = vsel %vm709, %v699, 2102212464
        %v712 = vsel %vm708, %v696, %v711
        %v713 = vsel %vm707, %v710, %v712
        %v714 = vsel %vm706, %v693, %v696
        %v715 = vsel %vm709, %v702, 920167782
        %v716 = vsel %vm708, %v699, %v715
        %v717 = vsel %vm707, %v714, %v716
        %v718 = vsel %vm706, %v696, %v699
        %v719 = vsel %vm709, %v705, 1326507024
        %v720 = vsel %vm708, %v702, %v719
        %v721 = vsel %vm707, %v718, %v720
        %v722 = vshll.u32 %v682, 8
        %v723 = vmul.u32.u64.compose %v722, %v721
        %v724 = vextract.low.u32 %v723
        %v725 = vextract.high.u32 %v723
        %v726 = vmul.u32.u64.compose %v722, %v717
        %v727 = vextract.low.u32 %v726
        %v728 = vextract.high.u32 %v726
        %v729 = vmul.u32 %v722, %v713
        %v730 = vadd.s32 %v725, %v727
        %vm731 = vc.u32 %v725, %v727
        %v732 = vadd.s32 %v728, 1
        %v733 = vsel %vm731, %v732, %v728
        %v734 = vadd.s32 %v729, %v733
        %v735 = vadd.s32 %v734, 536870912
        %v736 = vshrl.u32 %v735, 30
        %v737 = vshll.u32 %v736, 30
        %v738 = vsub.s32 %v734, %v737
        %vm739 = vcmp.lt.s32.totalorder %v738, 0
        %v740 = vsub.s32 0, %v738
        %v741 = vsel %vm739, %v740, %v738
        %v742 = vclz %v741
        %v743 = vsub.s32 %v742, 2
        %vm744 = vcmp.gt.s32.totalorder 0, %v743
        %v745 = vsel %vm744, 0, %v743
        %v746 = vsub.s32 32, %v745
        %v747 = vshll.u32 %v738, %v745
        %v748 = vshrl.u32 %v730, %v746
        %v749 = vor.u32 %v747, %v748
        %v750 = vsub.s32 4294967266, %v745
        %v751 = vadd.s32 %v750, 127
        %v752 = vshll.u32 %v751, 23
        %v753 = vor.u32 4788187, %v752
        %v754 = vand.u32 2147483647, %v753
        %v756 = vcvt.s32.f32 %v749
        %v757 = vmul.f32 %v756, %v754
        %v758 = vxor.u32 %v757, 2147483648
        %v759 = vsel %vm676, %v758, %v757
        %v760 = vsub.s32 4, %v736
        %v761 = vsel %vm676, %v760, %v736
        %v762 = vsel %vm675, %v569, %v759
        %v763 = vsel %vm675, 0, %v761
        %v764 = vcosq.f32.pop %v762
        %v765 = vsinq.f32.pop %v762
        %vm766 = vweird.f32 %v569
        %v767 = vadd.s32 %v763, 3
        %v768 = vand.u32 %v767, 3
        %vm769 = vcmp.lt.s32.totalorder %v768, 2
        %vm770 = vcmp.eq.s32.totalorder %v768, 0
        %v771 = vxor.u32 %v765, 2147483648
        %v772 = vsel %vm770, %v764, %v771
        %vm773 = vcmp.eq.s32.totalorder %v768, 2
        %v774 = vxor.u32 %v764, 2147483648
        %v775 = vsel %vm773, %v774, %v765
        %v776 = vsel %vm769, %v772, %v775
        %v777 = vsel %vm766, nan, %v776
        %v778 = vmul.f32 %v777, 0.17677669
        %v779 = vmul.f32 %v554, %v673
        %781 = vrot.lane.b32.xlu0 %v778, 16
        %v782 = vpop.permute.xlu0 %781
        %v784 = vmul.f32 %v554, %v782
        %786 = vrot.lane.b32.xlu0 %v784, 112
        %v787 = vpop.permute.xlu0 %786
        %v789 = vsub.f32 %v779, %v787
        %vm790 = vcmask 130048
        %791 = vst.msk [vmem:[%s142] sm:$0xff] %vm790, %v789
        %793 = vrot.lane.b32.xlu0 %v673, 16
        %v794 = vpop.permute.xlu0 %793
        %v796 = vmul.f32 %v554, %v794
        %v797 = vmul.f32 %v554, %v778
        %799 = vrot.lane.b32.xlu0 %v797, 16
        %v800 = vpop.permute.xlu0 %799
        %v802 = vadd.f32 %v796, %v800
        %vm803 = vcmask 261248
        %804 = vst.msk [vmem:[%s142] sm:$0xff] %vm803, %v802
        %s805 = sand.u32 %s79, 1
        %s806 = scalar_lea.sflag [#allocation7], %s805
        %s807 = sand.u32 %s79, 1
        %s808 = smul.addr %s807, 8
        %s809 = scalar_lea.vmem [#allocation6], %s808
        // Predicated region
        $region269: #{tpu_custom_call.1} parent=27 // pred_check
          %p810 = pneg %p89
        $region270: #{tpu_custom_call.1} parent=27 // pred_check_branch
          %812 = sbr.rel (%p810) target = $region272
        $region271: #{tpu_custom_call.1} parent=27 // pred_region
          %s814 = ssub.s32 128, 128
          %815 = vsyncadd %s806, %s814
          %s816 = smul.addr %s24, 128
          %s817 = scalar_lea.hbm %s4, %s816
          %s819 = sshll.u32 %s809, 4
          %s820 = int_to_ptr.vmem [resolvable:$true] %s819
          %822 = dma.vmem_to_hbm [thread:$0]  %s820, 128, %s817, %s806
        $region272: #{tpu_custom_call.1} parent=27 // pred_fallthru
          _
      $region28: #{tpu_custom_call.1} parent=5 // pred_fallthru
        _
      %p823 = scmp.le.s32.totalorder 2, %s19
      // Predicated region
      $region273: #{tpu_custom_call.1} parent=5 // pred_check
        %p824 = pneg %p823
      $region274: #{tpu_custom_call.1} parent=5 // pred_check_branch
        %826 = sbr.rel (%p824) target = $region276
      $region275: #{tpu_custom_call.1} parent=5 // pred_region
        %s827 = ssub.s32 %s19, 2
        // Predicated region
        $region277: #{tpu_custom_call.1} parent=275 // pred_check
          %p828 = pneg %p95
        $region278: #{tpu_custom_call.1} parent=275 // pred_check_branch
          %830 = sbr.rel (%p828) target = $region280
        $region279: #{tpu_custom_call.1} parent=275 // pred_region
          %s831 = sand.u32 %s80, 1
          %s832 = scalar_lea.sflag [#allocation7], %s831
          %s833 = sand.u32 %s80, 1
          %s834 = smul.addr %s833, 8
          %s835 = scalar_lea.vmem [#allocation6], %s834
          %836 = dma.done %s832, 128
        $region280: #{tpu_custom_call.1} parent=275 // pred_fallthru
          _
      $region276: #{tpu_custom_call.1} parent=5 // pred_fallthru
        _
    $region6: #{tpu_custom_call.1} parent=1 // loop_footer
      %s23 = sadd.s32 1, %s19
    $region7: #{tpu_custom_call.1} parent=1 // loop_footer_branch
      %18 = sbr.rel target = $region3
    $region8: #{tpu_custom_call.1} parent=1 // loop_exit
      _
    %837 = vsyncpa [#allocation7], 1
    %s838 = scalar_lea.sflag [#allocation7], 1
    %839 = vsyncpa %s838, 1
  %840 = vsyncmov [#allocation3]
  %s841 = vpop.sfrf %840
  %p842 = scmp.eq.s32.totalorder %s841, 0
  %p843 = pneg %p842
  %845 = shalt.err (%p843)
  %s846 = scalar_lea.sflag [#allocation3], 1
  %847 = vsyncmov %s846
  %s848 = vpop.sfrf %847
  %p849 = scmp.eq.s32.totalorder %s848, 0
  %p850 = pneg %p849
  %852 = shalt.err (%p850)
  %s853 = scalar_lea.sflag [#allocation3], 2
  %854 = vsyncmov %s853
  %s855 = vpop.sfrf %854
  %p856 = scmp.eq.s32.totalorder %s855, 0
  %p857 = pneg %p856
  %859 = shalt.err (%p857)
  %s860 = scalar_lea.sflag [#allocation3], 3
  %861 = vsyncmov %s860
  %s862 = vpop.sfrf %861
  %p863 = scmp.eq.s32.totalorder %s862, 0
  %p864 = pneg %p863
  %866 = shalt.err (%p864)
  %s867 = scalar_lea.sflag [#allocation3], 4
  %868 = vsyncmov %s867
  %s869 = vpop.sfrf %868
  %p870 = scmp.eq.s32.totalorder %s869, 0
  %p871 = pneg %p870
  %873 = shalt.err (%p871)
  %s874 = scalar_lea.sflag [#allocation3], 5
  %875 = vsyncmov %s874
  %s876 = vpop.sfrf %875
  %p877 = scmp.eq.s32.totalorder %s876, 0
  %p878 = pneg %p877
  %880 = shalt.err (%p878)
  %s881 = scalar_lea.sflag [#allocation3], 6
  %882 = vsyncmov %s881
  %s883 = vpop.sfrf %882
  %p884 = scmp.eq.s32.totalorder %s883, 0
  %p885 = pneg %p884
  %887 = shalt.err (%p885)
  %s888 = scalar_lea.sflag [#allocation3], 7
  %889 = vsyncmov %s888
  %s890 = vpop.sfrf %889
  %p891 = scmp.eq.s32.totalorder %s890, 0
  %p892 = pneg %p891
  %894 = shalt.err (%p892)

</llo_original>
